<compile_context>
chip_gen: v6e
topology: v6e:2x2x1
jax: 0.10.0
libtpu: 0.0.40
codegen_flags: <defaults>
</compile_context>

<pallas_src>
import functools

import jax
import jax.numpy as jnp
from jax.experimental import pallas as pl
from jax.experimental.pallas import tpu as pltpu

LANE = 128


def _round_up(n, m):
    return ((n + m - 1) // m) * m


def _pad_to(a, shape):
    return jnp.pad(a, [(0, s - d) for d, s in zip(a.shape, shape)])


# ----------------------------------------------------------------------------
# Pallas kernels
# ----------------------------------------------------------------------------
def _linear_kernel(x_ref, w_ref, *rest, apply_relu, has_bias):
    """y = x @ w (+ b) (+ ReLU).  x:(tm,Din) bf16, w:(Din,Dout) bf16, b:(1,Dout) f32."""
    if has_bias:
        b_ref, o_ref = rest
    else:
        (o_ref,) = rest
    y = jnp.dot(x_ref[...], w_ref[...], preferred_element_type=jnp.float32)
    if has_bias:
        y = y + b_ref[...]
    if apply_relu:
        y = jnp.maximum(y, 0.0)
    o_ref[...] = y.astype(o_ref.dtype)


def _fsmn_stack_kernel(h_ref, wp_ref, wl_ref, wr_ref, wa_ref, ba_ref, o_ref,
                       hscr_ref, pbuf_ref, *,
                       T, lorder, rorder, lstride, rstride, lp_al):
    """All FSMN layers fused, one batch element per `b` grid step.

    grid = (B, L); the layer axis L is sequential ("arbitrary") and the
    activations stay resident in the bf16 VMEM scratch `hscr_ref` across it.

    h:  (1, T, Dlin) bf16   input activations (only consumed at layer 0)
    wp: (1, Dlin, Dp) bf16  LinearTransform (no bias) for this layer
    wl: (1, lorder, Dp) f32 causal taps (tap lorder-1 hits the current frame)
    wr: (1, max(rorder,1), Dp) f32 lookahead taps (ignored when rorder == 0)
    wa: (1, Dp, Dlin) bf16, ba: (1, 1, Dlin) f32   AffineTransform
    o:  (1, T, Dlin) bf16   written only at the last layer
    pbuf: (lp_al + T + tail, Dp) f32 VMEM halo-staging buffer (never in HBM)
    """
    layer = pl.program_id(1)
    n_layers = pl.num_programs(1)
    Dp = pbuf_ref.shape[1]
    tail = pbuf_ref.shape[0] - (lp_al + T)

    # Layer 0: pull this batch element's activations into the resident scratch.
    @pl.when(layer == 0)
    def _():
        hscr_ref[...] = h_ref[0]

    h = hscr_ref[...]                                              # (T, Dlin) bf16

    # --- projection (MXU, bf16 x bf16 -> f32 accumulate) --------------------
    p = jnp.dot(h, wp_ref[0], preferred_element_type=jnp.float32)  # (T, Dp)

    # --- stage p with a zero time-halo; zero ONLY the halo rows -------------
    if lp_al > 0:
        pbuf_ref[:lp_al, :] = jnp.zeros((lp_al, Dp), jnp.float32)
    if tail > 0:
        pbuf_ref[lp_al + T:, :] = jnp.zeros((tail, Dp), jnp.float32)
    pbuf_ref[lp_al:lp_al + T, :] = p           # lp_al multiple of 8 -> aligned
    pp = pbuf_ref[...]

    # --- FSMN memory: identity + causal + lookahead FIR (VPU) ---------------
    wl = wl_ref[0]                                                 # (lorder, Dp) f32
    acc = p                                                        # identity path
    for i in range(lorder):
        d = (lorder - 1 - i) * lstride                             # look-back dist
        acc = acc + wl[i:i + 1, :] * pp[lp_al - d:lp_al - d + T, :]
    if rorder > 0:
        wr = wr_ref[0]
        for j in range(rorder):
            d = (j + 1) * rstride                                  # look-ahead dist
            acc = acc + wr[j:j + 1, :] * pp[lp_al + d:lp_al + d + T, :]

    # --- affine + ReLU (MXU + VPU); cast acc to bf16 only for the matmul ----
    y = jnp.dot(acc.astype(wa_ref.dtype), wa_ref[0],
                preferred_element_type=jnp.float32)
    y = jnp.maximum(y + ba_ref[0], 0.0)
    yb = y.astype(hscr_ref.dtype)
    hscr_ref[...] = yb                           # feed the next layer from VMEM

    @pl.when(layer == n_layers - 1)
    def _():
        o_ref[0] = yb.astype(o_ref.dtype)        # single HBM write per batch elt


# ----------------------------------------------------------------------------
# Wrappers around pallas_call
# ----------------------------------------------------------------------------
def linear(x2, w, b=None, *, apply_relu=False, out_dtype=None, tm=1024):
    """x2: (N, Din) @ w: (Din, Dout) (+ b) (+ ReLU), tiled over rows."""
    N, Din = x2.shape
    Dout = w.shape[1]
    out_dtype = out_dtype if out_dtype is not None else x2.dtype

    Np8 = _round_up(N, 8)
    if Np8 <= tm:
        tm_eff, Np = Np8, Np8
    else:
        tm_eff = tm
        Np = _round_up(N, tm_eff)
    if Np != N:
        # TODO(synk): handle the ragged last row-tile with an in-kernel mask
        # instead of this host-side pad/slice round trip of the activations.
        x2 = jnp.pad(x2, ((0, Np - N), (0, 0)))

    has_bias = b is not None
    in_specs = [
        pl.BlockSpec((tm_eff, Din), lambda i: (i, 0)),
        pl.BlockSpec((Din, Dout), lambda i: (0, 0)),
    ]
    args = [x2, w]
    if has_bias:
        in_specs.append(pl.BlockSpec((1, Dout), lambda i: (0, 0)))
        args.append(b.reshape(1, Dout).astype(jnp.float32))

    cost = pl.CostEstimate(
        flops=int(2 * Np * Din * Dout),
        transcendentals=0,
        bytes_accessed=int(x2.dtype.itemsize * (Np * Din + Din * Dout)
                           + jnp.dtype(out_dtype).itemsize * Np * Dout))

    out = pl.pallas_call(
        functools.partial(_linear_kernel, apply_relu=apply_relu,
                          has_bias=has_bias),
        out_shape=jax.ShapeDtypeStruct((Np, Dout), out_dtype),
        grid=(Np // tm_eff,),
        in_specs=in_specs,
        out_specs=pl.BlockSpec((tm_eff, Dout), lambda i: (i, 0)),
        compiler_params=pltpu.CompilerParams(
            dimension_semantics=("parallel",)),
        cost_estimate=cost,
    )(*args)
    return out[:N] if Np != N else out


def fsmn_stack(h, wp_all, wl_all, wr_all, wa_all, ba_all, *,
               lorder, rorder, lstride, rstride):
    """All fused FSMN layers: h -> ReLU(FsmnMemory(h @ wp) @ wa + ba), L times."""
    B, T, Dlin = h.shape
    L, _, Dp = wp_all.shape
    ro = wr_all.shape[1]
    left_pad = (lorder - 1) * lstride
    right_pad = rorder * rstride
    lp_al = _round_up(left_pad, 8)                     # aligned interior offset
    tp_scr = _round_up(lp_al + T + right_pad, 8)

    n_taps = lorder + rorder
    cost = pl.CostEstimate(
        flops=int(B * L * T * (4 * Dlin * Dp + 2 * (n_taps + 1) * Dp)),
        transcendentals=0,
        bytes_accessed=int(2 * 2 * B * T * Dlin
                           + B * L * (2 * 2 * Dlin * Dp
                                      + 4 * (lorder + ro) * Dp + 4 * Dlin)))

    return pl.pallas_call(
        functools.partial(_fsmn_stack_kernel, T=T, lorder=lorder,
                          rorder=rorder, lstride=lstride, rstride=rstride,
                          lp_al=lp_al),
        out_shape=jax.ShapeDtypeStruct((B, T, Dlin), h.dtype),
        grid=(B, L),
        in_specs=[
            pl.BlockSpec((1, T, Dlin), lambda b, l: (b, 0, 0)),   # fetched once/b
            pl.BlockSpec((1, Dlin, Dp), lambda b, l: (l, 0, 0)),
            pl.BlockSpec((1, lorder, Dp), lambda b, l: (l, 0, 0)),
            pl.BlockSpec((1, ro, Dp), lambda b, l: (l, 0, 0)),
            pl.BlockSpec((1, Dp, Dlin), lambda b, l: (l, 0, 0)),
            pl.BlockSpec((1, 1, Dlin), lambda b, l: (l, 0, 0)),
        ],
        out_specs=pl.BlockSpec((1, T, Dlin), lambda b, l: (b, 0, 0)),
        scratch_shapes=[pltpu.VMEM((T, Dlin), h.dtype),        # resident h (bf16)
                        pltpu.VMEM((tp_scr, Dp), jnp.float32)],  # FIR halo buffer
        compiler_params=pltpu.CompilerParams(
            dimension_semantics=("parallel", "arbitrary")),
        cost_estimate=cost,
    )(h, wp_all, wl_all, wr_all, wa_all, ba_all)
    # TODO(synk): for very long T (v7x 64 MiB VMEM) tile over time with an
    # explicit halo and fold (B, T_tiles) into the parallel axis.


# ----------------------------------------------------------------------------
# FSMNNet: parameters + forward
# ----------------------------------------------------------------------------
def init_params(key, *, input_dim, linear_dim, proj_dim, lorder, rorder,
                num_syn, fsmn_layers):
    ks = jax.random.split(key, 4 + 5 * fsmn_layers)
    it = iter(ks)
    scale = 0.1

    def rnd(k, shape):
        return scale * jax.random.normal(k, shape, dtype=jnp.float32)

    params = {
        "w1": rnd(next(it), (input_dim, linear_dim)),   # linear1 (with bias)
        "b1": rnd(next(it), (linear_dim,)),
        "w2": rnd(next(it), (linear_dim, num_syn)),     # linear2 (with bias)
        "b2": rnd(next(it), (num_syn,)),
        "layers": [],
    }
    for _ in range(fsmn_layers):
        params["layers"].append({
            "wp": rnd(next(it), (linear_dim, proj_dim)),  # LinearTransform (no bias)
            "wl": rnd(next(it), (lorder, proj_dim)),      # conv_left taps (groups=D)
            "wr": rnd(next(it), (rorder, proj_dim)),      # conv_right taps (groups=D)
            "wa": rnd(next(it), (proj_dim, linear_dim)),  # AffineTransform
            "ba": rnd(next(it), (linear_dim,)),
        })
    return params


def prepare_params(params, *, lane=LANE, compute_dtype=jnp.bfloat16):
    """Zero-pad every feature dim up to a multiple of 128 (exact), cast the
    matmul weights to bf16, and stack per-layer weights on a leading L axis
    so the whole FSMN stack runs as a single pallas_call."""
    w1, b1, w2, b2 = params["w1"], params["b1"], params["w2"], params["b2"]
    Din, Dlin = w1.shape
    Dsyn = w2.shape[1]
    Dp = params["layers"][0]["wp"].shape[1]
    lorder = params["layers"][0]["wl"].shape[0]
    rorder = params["layers"][0]["wr"].shape[0]
    Din_p, Dlin_p = _round_up(Din, lane), _round_up(Dlin, lane)
    Dp_p, Dsyn_p = _round_up(Dp, lane), _round_up(Dsyn, lane)

    wp_all, wl_all, wr_all, wa_all, ba_all = [], [], [], [], []
    for lp in params["layers"]:
        wp_all.append(_pad_to(lp["wp"], (Dlin_p, Dp_p)))
        wl_all.append(_pad_to(lp["wl"], (lorder, Dp_p)))
        if rorder > 0:
            wr_all.append(_pad_to(lp["wr"], (rorder, Dp_p)))
        else:
            wr_all.append(jnp.zeros((1, Dp_p), jnp.float32))
        wa_all.append(_pad_to(lp["wa"], (Dp_p, Dlin_p)))
        ba_all.append(_pad_to(lp["ba"], (Dlin_p,)).reshape(1, Dlin_p))

    return {
        "w1": _pad_to(w1, (Din_p, Dlin_p)).astype(compute_dtype),
        "b1": _pad_to(b1, (Dlin_p,)).astype(jnp.float32),
        "w2": _pad_to(w2, (Dlin_p, Dsyn_p)).astype(compute_dtype),
        "b2": _pad_to(b2, (Dsyn_p,)).astype(jnp.float32),
        "wp": jnp.stack(wp_all).astype(compute_dtype),     # (L, Dlin_p, Dp_p)
        "wl": jnp.stack(wl_all).astype(jnp.float32),        # (L, lorder, Dp_p)
        "wr": jnp.stack(wr_all).astype(jnp.float32),        # (L, max(ro,1), Dp_p)
        "wa": jnp.stack(wa_all).astype(compute_dtype),      # (L, Dp_p, Dlin_p)
        "ba": jnp.stack(ba_all).astype(jnp.float32),         # (L, 1, Dlin_p)
    }


def fsmn_net_forward(x, pparams, *, num_syn, lorder, rorder,
                     lstride=1, rstride=1, tm=1024):
    """x: (B, T, input_dim); pparams: output of prepare_params."""
    B, T, Din = x.shape
    Din_p = pparams["w1"].shape[0]
    cdt = pparams["w1"].dtype
    if Din_p != Din:
        x = jnp.pad(x, ((0, 0), (0, 0), (0, Din_p - Din)))
    x = x.astype(cdt)                                  # bf16 HBM reads downstream

    # linear1 + ReLU (row-tiled matmul kernel, bf16 out)
    h = linear(x.reshape(B * T, Din_p), pparams["w1"], pparams["b1"],
               apply_relu=True, out_dtype=cdt, tm=tm)
    Dlin_p = h.shape[1]
    h = h.reshape(B, T, Dlin_p)

    # all FSMN layers fused; h stays VMEM-resident across the layer axis
    h = fsmn_stack(h, pparams["wp"], pparams["wl"], pparams["wr"],
                   pparams["wa"], pparams["ba"],
                   lorder=lorder, rorder=rorder,
                   lstride=lstride, rstride=rstride)

    # linear2 (f32 out)
    y = linear(h.reshape(B * T, Dlin_p), pparams["w2"], pparams["b2"],
               apply_relu=False, out_dtype=jnp.float32, tm=tm)
    return y.reshape(B, T, -1)[:, :, :num_syn]


# Pure-JAX f32 reference (same math, no Pallas, unpadded params).
def ref_forward(x, params, *, lorder, rorder, lstride=1, rstride=1):
    def lin(h, w, b=None, relu=False):
        y = h @ w
        if b is not None:
            y = y + b
        return jnp.maximum(y, 0.0) if relu else y

    h = lin(x, params["w1"], params["b1"], relu=True)
    for lp in params["layers"]:
        p = lin(h, lp["wp"])
        B, T, D = p.shape
        left_pad = (lorder - 1) * lstride
        xpad = jnp.pad(p, ((0, 0), (left_pad, rorder * rstride), (0, 0)))
        acc = p
        for i in range(lorder):
            acc = acc + lp["wl"][i][None, None, :] * \
                xpad[:, i * lstride:i * lstride + T, :]
        for j in range(rorder):
            s = left_pad + (j + 1) * rstride
            acc = acc + lp["wr"][j][None, None, :] * xpad[:, s:s + T, :]
        h = lin(acc, lp["wa"], lp["ba"], relu=True)
    return lin(h, params["w2"], params["b2"])


if __name__ == "__main__":
    # small config consistent with
    # FSMNNet(input_dim, linear_dim, proj_dim, lorder, rorder, num_syn, fsmn_layers)
    B, T = 2, 16
    input_dim, linear_dim, proj_dim = 40, 32, 16
    lorder, rorder, num_syn, fsmn_layers = 3, 1, 5, 2

    key = jax.random.PRNGKey(0)
    kx, kp = jax.random.split(key)
    x = jax.random.normal(kx, (B, T, input_dim), dtype=jnp.float32)
    params = init_params(kp, input_dim=input_dim, linear_dim=linear_dim,
                         proj_dim=proj_dim, lorder=lorder, rorder=rorder,
                         num_syn=num_syn, fsmn_layers=fsmn_layers)

    pparams = prepare_params(params)       # one-time lane-128 pad + bf16 cast
    fwd = jax.jit(functools.partial(fsmn_net_forward, num_syn=num_syn,
                                    lorder=lorder, rorder=rorder,
                                    lstride=1, rstride=1))
    out = jax.block_until_ready(fwd(x, pparams))

    ref = ref_forward(x, params, lorder=lorder, rorder=rorder)
    assert out.shape == (B, T, num_syn)
    err = float(jnp.max(jnp.abs(out - ref)))
    # bf16 activations/weights vs f32 reference -> loosened tolerance.
    assert err < 5e-2, f"mismatch vs reference: max abs err {err}"

    print("KERNEL_OK")
</pallas_src>

<mosaic_0001>
module attributes {stable_mosaic.version = 11 : i64} {
  func.func @_linear_kernel(%arg0: i32, %arg1: memref<32x128xbf16, #tpu.memory_space<vmem>>, %arg2: memref<128x128xbf16, #tpu.memory_space<vmem>>, %arg3: memref<1x128xf32, #tpu.memory_space<vmem>>, %arg4: memref<32x128xbf16, #tpu.memory_space<vmem>>) attributes {dimension_semantics = [#tpu.dimension_semantics<parallel>], iteration_bounds = array<i64: 1>, scalar_prefetch = 0 : i64, scratch_operands = 0 : i64, tpu.core_type = #tpu.core_type<tc>, window_params = [{transform_indices = @transform_0, window_bounds = array<i64: 32, 128>}, {pipeline_mode = #tpu.pipeline_mode<synchronous>, transform_indices = @transform_1, window_bounds = array<i64: 128, 128>}, {pipeline_mode = #tpu.pipeline_mode<synchronous>, transform_indices = @transform_2, window_bounds = array<i64: 1, 128>}, {transform_indices = @transform_3, window_bounds = array<i64: 32, 128>}]} {
    %c0 = arith.constant 0 : index
    %c0_0 = arith.constant 0 : index
    %0 = vector.load %arg1[%c0, %c0_0] : memref<32x128xbf16, #tpu.memory_space<vmem>>, vector<32x128xbf16>
    %c0_1 = arith.constant 0 : index
    %c0_2 = arith.constant 0 : index
    %1 = vector.load %arg2[%c0_1, %c0_2] : memref<128x128xbf16, #tpu.memory_space<vmem>>, vector<128x128xbf16>
    %cst = arith.constant dense<0.000000e+00> : vector<32x128xf32>
    %2 = tpu.matmul %0, %1, %cst {dimension_numbers = #tpu.dot_dimension_numbers<[1], [0], [0], [1], [0, 0, 1, 1], [], []>} : vector<32x128xbf16>, vector<128x128xbf16>, vector<32x128xf32> -> vector<32x128xf32>
    %c0_3 = arith.constant 0 : index
    %c0_4 = arith.constant 0 : index
    %3 = vector.load %arg3[%c0_3, %c0_4] : memref<1x128xf32, #tpu.memory_space<vmem>>, vector<1x128xf32>
    %4 = vector.broadcast %3 : vector<1x128xf32> to vector<32x128xf32>
    %5 = arith.addf %2, %4 : vector<32x128xf32>
    %cst_5 = arith.constant 0.000000e+00 : f32
    %6 = vector.broadcast %cst_5 : f32 to vector<32x128xf32>
    %7 = arith.maximumf %5, %6 : vector<32x128xf32>
    %8 = arith.truncf %7 : vector<32x128xf32> to vector<32x128xbf16>
    %c0_6 = arith.constant 0 : index
    %c0_7 = arith.constant 0 : index
    %9 = vector.load %arg4[%c0_6, %c0_7] : memref<32x128xbf16, #tpu.memory_space<vmem>>, vector<32x128xbf16>
    tpu.vector_store %arg4[%c0_6, %c0_7], %8 {strides = array<i32>} : memref<32x128xbf16, #tpu.memory_space<vmem>>, vector<32x128xbf16>,
    return
  }
  func.func @transform_0(%arg0: i32) -> (i32, i32) {
    %c0_i32 = arith.constant 0 : i32
    %c0_i32_0 = arith.constant 0 : i32
    return %arg0, %c0_i32 : i32, i32
  }
  func.func @transform_1(%arg0: i32) -> (i32, i32) {
    %c0_i32 = arith.constant 0 : i32
    %c0_i32_0 = arith.constant 0 : i32
    %c0_i32_1 = arith.constant 0 : i32
    return %c0_i32, %c0_i32_0 : i32, i32
  }
  func.func @transform_2(%arg0: i32) -> (i32, i32) {
    %c0_i32 = arith.constant 0 : i32
    %c0_i32_0 = arith.constant 0 : i32
    %c0_i32_1 = arith.constant 0 : i32
    return %c0_i32, %c0_i32_0 : i32, i32
  }
  func.func @transform_3(%arg0: i32) -> (i32, i32) {
    %c0_i32 = arith.constant 0 : i32
    %c0_i32_0 = arith.constant 0 : i32
    return %arg0, %c0_i32 : i32, i32
  }
}

module attributes {stable_mosaic.version = 11 : i64} {
  func.func @_linear_kernel(%arg0: i32, %arg1: memref<32x128xbf16, #tpu.memory_space<vmem>>, %arg2: memref<128x128xbf16, #tpu.memory_space<vmem>>, %arg3: memref<1x128xf32, #tpu.memory_space<vmem>>, %arg4: memref<32x128xf32, #tpu.memory_space<vmem>>) attributes {dimension_semantics = [#tpu.dimension_semantics<parallel>], iteration_bounds = array<i64: 1>, scalar_prefetch = 0 : i64, scratch_operands = 0 : i64, tpu.core_type = #tpu.core_type<tc>, window_params = [{transform_indices = @transform_0, window_bounds = array<i64: 32, 128>}, {pipeline_mode = #tpu.pipeline_mode<synchronous>, transform_indices = @transform_1, window_bounds = array<i64: 128, 128>}, {pipeline_mode = #tpu.pipeline_mode<synchronous>, transform_indices = @transform_2, window_bounds = array<i64: 1, 128>}, {transform_indices = @transform_3, window_bounds = array<i64: 32, 128>}]} {
    %c0 = arith.constant 0 : index
    %c0_0 = arith.constant 0 : index
    %0 = vector.load %arg1[%c0, %c0_0] : memref<32x128xbf16, #tpu.memory_space<vmem>>, vector<32x128xbf16>
    %c0_1 = arith.constant 0 : index
    %c0_2 = arith.constant 0 : index
    %1 = vector.load %arg2[%c0_1, %c0_2] : memref<128x128xbf16, #tpu.memory_space<vmem>>, vector<128x128xbf16>
    %cst = arith.constant dense<0.000000e+00> : vector<32x128xf32>
    %2 = tpu.matmul %0, %1, %cst {dimension_numbers = #tpu.dot_dimension_numbers<[1], [0], [0], [1], [0, 0, 1, 1], [], []>} : vector<32x128xbf16>, vector<128x128xbf16>, vector<32x128xf32> -> vector<32x128xf32>
    %c0_3 = arith.constant 0 : index
    %c0_4 = arith.constant 0 : index
    %3 = vector.load %arg3[%c0_3, %c0_4] : memref<1x128xf32, #tpu.memory_space<vmem>>, vector<1x128xf32>
    %4 = vector.broadcast %3 : vector<1x128xf32> to vector<32x128xf32>
    %5 = arith.addf %2, %4 : vector<32x128xf32>
    %c0_5 = arith.constant 0 : index
    %c0_6 = arith.constant 0 : index
    %6 = vector.load %arg4[%c0_5, %c0_6] : memref<32x128xf32, #tpu.memory_space<vmem>>, vector<32x128xf32>
    tpu.vector_store %arg4[%c0_5, %c0_6], %5 {strides = array<i32>} : memref<32x128xf32, #tpu.memory_space<vmem>>, vector<32x128xf32>,
    return
  }
  func.func @transform_0(%arg0: i32) -> (i32, i32) {
    %c0_i32 = arith.constant 0 : i32
    %c0_i32_0 = arith.constant 0 : i32
    return %arg0, %c0_i32 : i32, i32
  }
  func.func @transform_1(%arg0: i32) -> (i32, i32) {
    %c0_i32 = arith.constant 0 : i32
    %c0_i32_0 = arith.constant 0 : i32
    %c0_i32_1 = arith.constant 0 : i32
    return %c0_i32, %c0_i32_0 : i32, i32
  }
  func.func @transform_2(%arg0: i32) -> (i32, i32) {
    %c0_i32 = arith.constant 0 : i32
    %c0_i32_0 = arith.constant 0 : i32
    %c0_i32_1 = arith.constant 0 : i32
    return %c0_i32, %c0_i32_0 : i32, i32
  }
  func.func @transform_3(%arg0: i32) -> (i32, i32) {
    %c0_i32 = arith.constant 0 : i32
    %c0_i32_0 = arith.constant 0 : i32
    return %arg0, %c0_i32 : i32, i32
  }
}

module attributes {stable_mosaic.version = 11 : i64} {
  func.func @_fsmn_stack_kernel(%arg0: i32, %arg1: i32, %arg2: memref<1x16x128xbf16, #tpu.memory_space<vmem>>, %arg3: memref<1x128x128xbf16, #tpu.memory_space<vmem>>, %arg4: memref<1x3x128xf32, #tpu.memory_space<vmem>>, %arg5: memref<1x1x128xf32, #tpu.memory_space<vmem>>, %arg6: memref<1x128x128xbf16, #tpu.memory_space<vmem>>, %arg7: memref<1x1x128xf32, #tpu.memory_space<vmem>>, %arg8: memref<1x16x128xbf16, #tpu.memory_space<vmem>>, %arg9: memref<16x128xbf16, #tpu.memory_space<vmem>>, %arg10: memref<32x128xf32, #tpu.memory_space<vmem>>) attributes {dimension_semantics = [#tpu.dimension_semantics<parallel>, #tpu.dimension_semantics<arbitrary>], iteration_bounds = array<i64: 2, 2>, scalar_prefetch = 0 : i64, scratch_operands = 2 : i64, tpu.core_type = #tpu.core_type<tc>, window_params = [{transform_indices = @transform_0, window_bounds = array<i64: 1, 16, 128>}, {transform_indices = @transform_1, window_bounds = array<i64: 1, 128, 128>}, {transform_indices = @transform_2, window_bounds = array<i64: 1, 3, 128>}, {transform_indices = @transform_3, window_bounds = array<i64: 1, 1, 128>}, {transform_indices = @transform_4, window_bounds = array<i64: 1, 128, 128>}, {transform_indices = @transform_5, window_bounds = array<i64: 1, 1, 128>}, {transform_indices = @transform_6, window_bounds = array<i64: 1, 16, 128>}]} {
    %c0_i32 = arith.constant 0 : i32
    %0 = arith.cmpi eq, %arg1, %c0_i32 : i32
    %1 = arith.extui %0 : i1 to i32
    %c0_i32_0 = arith.constant 0 : i32
    %2 = arith.cmpi ne, %1, %c0_i32_0 : i32
    scf.if %2 {
      %c0_30 = arith.constant 0 : index
      %c0_31 = arith.constant 0 : index
      %c0_32 = arith.constant 0 : index
      %51 = vector.load %arg2[%c0_30, %c0_31, %c0_32] : memref<1x16x128xbf16, #tpu.memory_space<vmem>>, vector<1x16x128xbf16>
      %52 = vector.shape_cast %51 : vector<1x16x128xbf16> to vector<16x128xbf16>
      %c0_33 = arith.constant 0 : index
      %c0_34 = arith.constant 0 : index
      %53 = vector.load %arg9[%c0_33, %c0_34] : memref<16x128xbf16, #tpu.memory_space<vmem>>, vector<16x128xbf16>
      tpu.vector_store %arg9[%c0_33, %c0_34], %52 {strides = array<i32>} : memref<16x128xbf16, #tpu.memory_space<vmem>>, vector<16x128xbf16>,
    } else {
    }
    %c0 = arith.constant 0 : index
    %c0_1 = arith.constant 0 : index
    %3 = vector.load %arg9[%c0, %c0_1] : memref<16x128xbf16, #tpu.memory_space<vmem>>, vector<16x128xbf16>
    %c0_2 = arith.constant 0 : index
    %c0_3 = arith.constant 0 : index
    %c0_4 = arith.constant 0 : index
    %4 = vector.load %arg3[%c0_2, %c0_3, %c0_4] : memref<1x128x128xbf16, #tpu.memory_space<vmem>>, vector<1x128x128xbf16>
    %5 = vector.shape_cast %4 : vector<1x128x128xbf16> to vector<128x128xbf16>
    %cst = arith.constant dense<0.000000e+00> : vector<16x128xf32>
    %6 = tpu.matmul %3, %5, %cst {dimension_numbers = #tpu.dot_dimension_numbers<[1], [0], [0], [1], [0, 0, 1, 1], [], []>} : vector<16x128xbf16>, vector<128x128xbf16>, vector<16x128xf32> -> vector<16x128xf32>
    %cst_5 = arith.constant 0.000000e+00 : f32
    %7 = vector.broadcast %cst_5 : f32 to vector<8x128xf32>
    %c0_6 = arith.constant 0 : index
    %c0_7 = arith.constant 0 : index
    %8 = vector.load %arg10[%c0_6, %c0_7] : memref<32x128xf32, #tpu.memory_space<vmem>>, vector<8x128xf32>
    tpu.vector_store %arg10[%c0_6, %c0_7], %7 {strides = array<i32>} : memref<32x128xf32, #tpu.memory_space<vmem>>, vector<8x128xf32>,
    %cst_8 = arith.constant 0.000000e+00 : f32
    %9 = vector.broadcast %cst_8 : f32 to vector<8x128xf32>
    %c24 = arith.constant 24 : index
    %c0_9 = arith.constant 0 : index
    %10 = vector.load %arg10[%c24, %c0_9] : memref<32x128xf32, #tpu.memory_space<vmem>>, vector<8x128xf32>
    tpu.vector_store %arg10[%c24, %c0_9], %9 {strides = array<i32>} : memref<32x128xf32, #tpu.memory_space<vmem>>, vector<8x128xf32>,
    %c8 = arith.constant 8 : index
    %c0_10 = arith.constant 0 : index
    %11 = vector.load %arg10[%c8, %c0_10] : memref<32x128xf32, #tpu.memory_space<vmem>>, vector<16x128xf32>
    tpu.vector_store %arg10[%c8, %c0_10], %6 {strides = array<i32>} : memref<32x128xf32, #tpu.memory_space<vmem>>, vector<16x128xf32>,
    %c0_11 = arith.constant 0 : index
    %c0_12 = arith.constant 0 : index
    %12 = vector.load %arg10[%c0_11, %c0_12] : memref<32x128xf32, #tpu.memory_space<vmem>>, vector<32x128xf32>
    %c0_13 = arith.constant 0 : index
    %c0_14 = arith.constant 0 : index
    %c0_15 = arith.constant 0 : index
    %13 = vector.load %arg4[%c0_13, %c0_14, %c0_15] : memref<1x3x128xf32, #tpu.memory_space<vmem>>, vector<1x3x128xf32>
    %14 = vector.shape_cast %13 : vector<1x3x128xf32> to vector<3x128xf32>
    %15 = vector.extract_strided_slice %14 {offsets = [0, 0], sizes = [1, 128], strides = [1, 1]} : vector<3x128xf32> to vector<1x128xf32>
    %16 = vector.extract_strided_slice %12 {offsets = [6, 0], sizes = [16, 128], strides = [1, 1]} : vector<32x128xf32> to vector<16x128xf32>
    %17 = vector.broadcast %15 : vector<1x128xf32> to vector<16x128xf32>
    %18 = arith.mulf %17, %16 : vector<16x128xf32>
    %19 = arith.addf %6, %18 : vector<16x128xf32>
    %20 = vector.extract_strided_slice %14 {offsets = [1, 0], sizes = [1, 128], strides = [1, 1]} : vector<3x128xf32> to vector<1x128xf32>
    %21 = vector.extract_strided_slice %12 {offsets = [7, 0], sizes = [16, 128], strides = [1, 1]} : vector<32x128xf32> to vector<16x128xf32>
    %22 = vector.broadcast %20 : vector<1x128xf32> to vector<16x128xf32>
    %23 = arith.mulf %22, %21 : vector<16x128xf32>
    %24 = arith.addf %19, %23 : vector<16x128xf32>
    %25 = vector.extract_strided_slice %14 {offsets = [2, 0], sizes = [1, 128], strides = [1, 1]} : vector<3x128xf32> to vector<1x128xf32>
    %26 = vector.extract_strided_slice %12 {offsets = [8, 0], sizes = [16, 128], strides = [1, 1]} : vector<32x128xf32> to vector<16x128xf32>
    %27 = vector.broadcast %25 : vector<1x128xf32> to vector<16x128xf32>
    %28 = arith.mulf %27, %26 : vector<16x128xf32>
    %29 = arith.addf %24, %28 : vector<16x128xf32>
    %c0_16 = arith.constant 0 : index
    %c0_17 = arith.constant 0 : index
    %c0_18 = arith.constant 0 : index
    %30 = vector.load %arg5[%c0_16, %c0_17, %c0_18] : memref<1x1x128xf32, #tpu.memory_space<vmem>>, vector<1x1x128xf32>
    %31 = vector.shape_cast %30 : vector<1x1x128xf32> to vector<1x128xf32>
    %32 = vector.extract_strided_slice %12 {offsets = [9, 0], sizes = [16, 128], strides = [1, 1]} : vector<32x128xf32> to vector<16x128xf32>
    %33 = vector.broadcast %31 : vector<1x128xf32> to vector<16x128xf32>
    %34 = arith.mulf %33, %32 : vector<16x128xf32>
    %35 = arith.addf %29, %34 : vector<16x128xf32>
    %36 = arith.truncf %35 : vector<16x128xf32> to vector<16x128xbf16>
    %c0_19 = arith.constant 0 : index
    %c0_20 = arith.constant 0 : index
    %c0_21 = arith.constant 0 : index
    %37 = vector.load %arg6[%c0_19, %c0_20, %c0_21] : memref<1x128x128xbf16, #tpu.memory_space<vmem>>, vector<1x128x128xbf16>
    %38 = vector.shape_cast %37 : vector<1x128x128xbf16> to vector<128x128xbf16>
    %cst_22 = arith.constant dense<0.000000e+00> : vector<16x128xf32>
    %39 = tpu.matmul %36, %38, %cst_22 {dimension_numbers = #tpu.dot_dimension_numbers<[1], [0], [0], [1], [0, 0, 1, 1], [], []>} : vector<16x128xbf16>, vector<128x128xbf16>, vector<16x128xf32> -> vector<16x128xf32>
    %c0_23 = arith.constant 0 : index
    %c0_24 = arith.constant 0 : index
    %c0_25 = arith.constant 0 : index
    %40 = vector.load %arg7[%c0_23, %c0_24, %c0_25] : memref<1x1x128xf32, #tpu.memory_space<vmem>>, vector<1x1x128xf32>
    %41 = vector.shape_cast %40 : vector<1x1x128xf32> to vector<1x128xf32>
    %42 = vector.broadcast %41 : vector<1x128xf32> to vector<16x128xf32>
    %43 = arith.addf %39, %42 : vector<16x128xf32>
    %cst_26 = arith.constant 0.000000e+00 : f32
    %44 = vector.broadcast %cst_26 : f32 to vector<16x128xf32>
    %45 = arith.maximumf %43, %44 : vector<16x128xf32>
    %46 = arith.truncf %45 : vector<16x128xf32> to vector<16x128xbf16>
    %c0_27 = arith.constant 0 : index
    %c0_28 = arith.constant 0 : index
    %47 = vector.load %arg9[%c0_27, %c0_28] : memref<16x128xbf16, #tpu.memory_space<vmem>>, vector<16x128xbf16>
    tpu.vector_store %arg9[%c0_27, %c0_28], %46 {strides = array<i32>} : memref<16x128xbf16, #tpu.memory_space<vmem>>, vector<16x128xbf16>,
    %c1_i32 = arith.constant 1 : i32
    %48 = arith.cmpi eq, %arg1, %c1_i32 : i32
    %49 = arith.extui %48 : i1 to i32
    %c0_i32_29 = arith.constant 0 : i32
    %50 = arith.cmpi ne, %49, %c0_i32_29 : i32
    scf.if %50 {
      %c0_30 = arith.constant 0 : index
      %c0_31 = arith.constant 0 : index
      %c0_32 = arith.constant 0 : index
      %51 = vector.load %arg8[%c0_30, %c0_31, %c0_32] : memref<1x16x128xbf16, #tpu.memory_space<vmem>>, vector<1x16x128xbf16>
      %52 = vector.shape_cast %51 : vector<1x16x128xbf16> to vector<16x128xbf16>
      %53 = vector.shape_cast %46 : vector<16x128xbf16> to vector<1x16x128xbf16>
      tpu.vector_store %arg8[%c0_30, %c0_31, %c0_32], %53 {strides = array<i32>} : memref<1x16x128xbf16, #tpu.memory_space<vmem>>, vector<1x16x128xbf16>,
    } else {
    }
    return
  }
  func.func @transform_0(%arg0: i32, %arg1: i32) -> (i32, i32, i32) {
    %c0_i32 = arith.constant 0 : i32
    %c0_i32_0 = arith.constant 0 : i32
    %c0_i32_1 = arith.constant 0 : i32
    return %arg0, %c0_i32, %c0_i32_0 : i32, i32, i32
  }
  func.func @transform_1(%arg0: i32, %arg1: i32) -> (i32, i32, i32) {
    %c0_i32 = arith.constant 0 : i32
    %c0_i32_0 = arith.constant 0 : i32
    %c0_i32_1 = arith.constant 0 : i32
    return %arg1, %c0_i32, %c0_i32_0 : i32, i32, i32
  }
  func.func @transform_2(%arg0: i32, %arg1: i32) -> (i32, i32, i32) {
    %c0_i32 = arith.constant 0 : i32
    %c0_i32_0 = arith.constant 0 : i32
    %c0_i32_1 = arith.constant 0 : i32
    return %arg1, %c0_i32, %c0_i32_0 : i32, i32, i32
  }
  func.func @transform_3(%arg0: i32, %arg1: i32) -> (i32, i32, i32) {
    %c0_i32 = arith.constant 0 : i32
    %c0_i32_0 = arith.constant 0 : i32
    %c0_i32_1 = arith.constant 0 : i32
    return %arg1, %c0_i32, %c0_i32_0 : i32, i32, i32
  }
  func.func @transform_4(%arg0: i32, %arg1: i32) -> (i32, i32, i32) {
    %c0_i32 = arith.constant 0 : i32
    %c0_i32_0 = arith.constant 0 : i32
    %c0_i32_1 = arith.constant 0 : i32
    return %arg1, %c0_i32, %c0_i32_0 : i32, i32, i32
  }
  func.func @transform_5(%arg0: i32, %arg1: i32) -> (i32, i32, i32) {
    %c0_i32 = arith.constant 0 : i32
    %c0_i32_0 = arith.constant 0 : i32
    %c0_i32_1 = arith.constant 0 : i32
    return %arg1, %c0_i32, %c0_i32_0 : i32, i32, i32
  }
  func.func @transform_6(%arg0: i32, %arg1: i32) -> (i32, i32, i32) {
    %c0_i32 = arith.constant 0 : i32
    %c0_i32_0 = arith.constant 0 : i32
    %c0_i32_1 = arith.constant 0 : i32
    return %arg0, %c0_i32, %c0_i32_0 : i32, i32, i32
  }
}

</mosaic_0001>

<llo_original>
// kernel: fsmn_net_forward.3
$region0: #{fsmn_net_forward.3}
  #allocation0 [shape = 'u32[]', space=smem, size = 0x4, offset = 0x4, fixed_abs, tag = 'smem constant byte address 0x4 - core index']
  #allocation1 [shape = 'u32[144,128]{1,0:T(1,128)}', space=vmem, size = 0x12000, scoped, tag = 'internal scratch']
  %s0 = inlined_call_operand.vmem [shape: bf16[32,128], index: 0, kind: input, shape index: {}]
  %s1 = inlined_call_operand.hbm [shape: bf16[128,128], index: 1, kind: input, shape index: {}]
  %s2 = inlined_call_operand.hbm [shape: f32[1,128], index: 2, kind: input, shape index: {}]
  %s3 = inlined_call_operand.vmem [shape: bf16[32,128], index: 3, kind: output, shape index: {}]
  %s4 = sld [smem:[#allocation0]]
  $region30: #{fsmn_net_forward.3} parent=0
    _
  %s6 = ssub.s32 1, %s4
  %s7 = scalar_select 0, %s6, %s4
  $region1: #{fsmn_net_forward.3} parent=0
    #allocation2 [shape = 'u8[32768]{0}', space=vmem, size = 0x8000, scoped, tag = 'input window, operand 1, single buffered']
    #allocation3 [shape = 's32[1]{0}', space=sflag, size = 0x4, scoped, tag = 'scoped memory for fsmn_net_forward.3']
    #allocation4 [shape = 'u8[512]{0}', space=vmem, size = 0x400, scoped, tag = 'input window, operand 2, single buffered']
    #allocation5 [shape = 's32[1]{0}', space=sflag, size = 0x4, scoped, tag = 'scoped memory for fsmn_net_forward.3']
    %8 = vsyncpa [#allocation3], 0
    %9 = vsyncpa [#allocation5], 0
    // Predicated region
    $region2: #{fsmn_net_forward.3} parent=1 // pred_check
      _
    $region3: #{fsmn_net_forward.3} parent=1 // pred_check_branch
      %11 = sbr.rel (0) target = $region5
    $region4: #{fsmn_net_forward.3} parent=1 // pred_region
      _
    $region5: #{fsmn_net_forward.3} parent=1 // pred_fallthru
      _
    // Predicated region
    $region6: #{fsmn_net_forward.3} parent=1 // pred_check
      _
    $region7: #{fsmn_net_forward.3} parent=1 // pred_check_branch
      %13 = sbr.rel (0) target = $region9
    $region8: #{fsmn_net_forward.3} parent=1 // pred_region
      %s15 = ssub.s32 1024, 1024
      %16 = vsyncadd [#allocation3], %s15
      %s17 = sshll.u32 [#allocation2], 4
      %s18 = int_to_ptr.vmem [resolvable:$true] %s17
      %23 = dma.hbm_to_vmem [thread:$0]  %s1, 1024, %s18, [#allocation3], 64, 64, 4
    $region9: #{fsmn_net_forward.3} parent=1 // pred_fallthru
      _
    // Predicated region
    $region10: #{fsmn_net_forward.3} parent=1 // pred_check
      _
    $region11: #{fsmn_net_forward.3} parent=1 // pred_check_branch
      %25 = sbr.rel (0) target = $region13
    $region12: #{fsmn_net_forward.3} parent=1 // pred_region
      %s27 = ssub.s32 16, 16
      %28 = vsyncadd [#allocation5], %s27
      %s30 = sshll.u32 [#allocation4], 4
      %s31 = int_to_ptr.vmem [resolvable:$true] %s30
      %33 = dma.hbm_to_vmem [thread:$0]  %s2, 16, %s31, [#allocation5]
    $region13: #{fsmn_net_forward.3} parent=1 // pred_fallthru
      _
    // Predicated region
    $region14: #{fsmn_net_forward.3} parent=1 // pred_check
      _
    $region15: #{fsmn_net_forward.3} parent=1 // pred_check_branch
      %35 = sbr.rel (0) target = $region17
    $region16: #{fsmn_net_forward.3} parent=1 // pred_region
      %36 = dma.done [#allocation3], 1024
    $region17: #{fsmn_net_forward.3} parent=1 // pred_fallthru
      _
    // Predicated region
    $region18: #{fsmn_net_forward.3} parent=1 // pred_check
      _
    $region19: #{fsmn_net_forward.3} parent=1 // pred_check_branch
      %38 = sbr.rel (0) target = $region21
    $region20: #{fsmn_net_forward.3} parent=1 // pred_region
      %39 = dma.done [#allocation5], 16
    $region21: #{fsmn_net_forward.3} parent=1 // pred_fallthru
      _
    %v41 = vld [vmem:[%s0] sm:$0xf]
    %v42 = vld [vmem:[%s0 + $0x4] sm:$0xf]
    %v43 = vld [vmem:[%s0 + $0x8] sm:$0xf]
    %v44 = vld [vmem:[%s0 + $0xc] sm:$0xf]
    %v45 = vld [vmem:[#allocation2] sm:$0xf]
    %v46 = vld [vmem:[#allocation2 + $0x4] sm:$0xf]
    %v47 = vld [vmem:[#allocation2 + $0x8] sm:$0xf]
    %v48 = vld [vmem:[#allocation2 + $0xc] sm:$0xf]
    %v49 = vld [vmem:[#allocation2 + $0x10] sm:$0xf]
    %v50 = vld [vmem:[#allocation2 + $0x14] sm:$0xf]
    %v51 = vld [vmem:[#allocation2 + $0x18] sm:$0xf]
    %v52 = vld [vmem:[#allocation2 + $0x1c] sm:$0xf]
    %v53 = vld [vmem:[#allocation2 + $0x20] sm:$0xf]
    %v54 = vld [vmem:[#allocation2 + $0x24] sm:$0xf]
    %v55 = vld [vmem:[#allocation2 + $0x28] sm:$0xf]
    %v56 = vld [vmem:[#allocation2 + $0x2c] sm:$0xf]
    %v57 = vld [vmem:[#allocation2 + $0x30] sm:$0xf]
    %v58 = vld [vmem:[#allocation2 + $0x34] sm:$0xf]
    %v59 = vld [vmem:[#allocation2 + $0x38] sm:$0xf]
    %v60 = vld [vmem:[#allocation2 + $0x3c] sm:$0xf]
    %v61 = vld [vmem:[#allocation4] sm:$0x1]
    %v63 = vlaneseq
    %v64 = vshrl.u32 %v63, 7
    %v65 = vsub.s32 0, %v64
    %v66 = vrot.slane %v61, %v65
    %v72 = vunpack.c.l.b16 %v41
    %v73 = vunpack.c.l.b16 %v42
    %v74 = vunpack.c.l.b16 %v43
    %v75 = vunpack.c.l.b16 %v44
    %v76 = vpack.c.b16 %v73, %v72
    %v77 = vpack.c.b16 %v75, %v74
    %v96 = vunpack.c.l.b16 %v45
    %v97 = vunpack.c.l.b16 %v46
    %v98 = vunpack.c.l.b16 %v47
    %v99 = vunpack.c.l.b16 %v48
    %v100 = vunpack.c.l.b16 %v49
    %v101 = vunpack.c.l.b16 %v50
    %v102 = vunpack.c.l.b16 %v51
    %v103 = vunpack.c.l.b16 %v52
    %v104 = vunpack.c.l.b16 %v53
    %v105 = vunpack.c.l.b16 %v54
    %v106 = vunpack.c.l.b16 %v55
    %v107 = vunpack.c.l.b16 %v56
    %v108 = vunpack.c.l.b16 %v57
    %v109 = vunpack.c.l.b16 %v58
    %v110 = vunpack.c.l.b16 %v59
    %v111 = vunpack.c.l.b16 %v60
    %v112 = vpack.c.b16 %v97, %v96
    %v113 = vpack.c.b16 %v99, %v98
    %v114 = vpack.c.b16 %v101, %v100
    %v115 = vpack.c.b16 %v103, %v102
    %v116 = vpack.c.b16 %v105, %v104
    %v117 = vpack.c.b16 %v107, %v106
    %v118 = vpack.c.b16 %v109, %v108
    %v119 = vpack.c.b16 %v111, %v110
    %128 = vmatprep.subr.bf16.mxu0 0
    %129 = vmatpush1.bf16.msra.mxu0 %v119
    %130 = vmatprep.subr.bf16.mxu0 0
    %131 = vmatpush1.bf16.msra.mxu0 %v118
    %132 = vmatprep.subr.bf16.mxu0 0
    %133 = vmatpush1.bf16.msra.mxu0 %v117
    %134 = vmatprep.subr.bf16.mxu0 0
    %135 = vmatpush1.bf16.msra.mxu0 %v116
    %136 = vmatprep.subr.bf16.mxu0 0
    %137 = vmatpush1.bf16.msra.mxu0 %v115
    %138 = vmatprep.subr.bf16.mxu0 0
    %139 = vmatpush1.bf16.msra.mxu0 %v114
    %140 = vmatprep.subr.bf16.mxu0 0
    %141 = vmatpush1.bf16.msra.mxu0 %v113
    %142 = vmatprep.subr.bf16.mxu0 0
    %143 = vmatpush1.bf16.msra.mxu0 %v112
    %144 = vmatprep.subr.bf16.mxu0 0
    %145 = vmatpush2.bf16.msra.mxu0 0
    %146 = vmatprep.subr.bf16.mxu0 0
    %147 = vmatpush2.bf16.msra.mxu0 0
    %148 = vmatprep.subr.bf16.mxu0 0
    %149 = vmatpush2.bf16.msra.mxu0 0
    %150 = vmatprep.subr.bf16.mxu0 0
    %151 = vmatpush2.bf16.msra.mxu0 0
    %152 = vmatprep.subr.bf16.mxu0 0
    %153 = vmatpush2.bf16.msra.mxu0 0
    %154 = vmatprep.subr.bf16.mxu0 0
    %155 = vmatpush2.bf16.msra.mxu0 0
    %156 = vmatprep.subr.bf16.mxu0 0
    %157 = vmatpush2.bf16.msra.mxu0 0
    %158 = vmatprep.subr.bf16.mxu0 0
    %159 = vmatpush2.bf16.msra.mxu0 0
    %160 = vmatprep.mubr.bf16.mxu0 0
    %161 = vmatmul.mubr.bf16.gmra.mxu0 %v76
    %v162 = vpop.f32.mrf.mxu0
    %v163 = vadd.f32 %v66, %v162
    %v164 = vpop.f32.mrf.mxu0
    %v165 = vpop.f32.mrf.mxu0
    %v166 = vadd.f32 %v66, %v165
    %v167 = vpop.f32.mrf.mxu0
    %168 = vmatprep.mubr.bf16.mxu0 0
    %169 = vmatmul.mubr.bf16.gmra.mxu0 %v77
    %v170 = vpop.f32.mrf.mxu0
    %v171 = vadd.f32 %v66, %v170
    %v172 = vpop.f32.mrf.mxu0
    %v173 = vpop.f32.mrf.mxu0
    %v174 = vadd.f32 %v66, %v173
    %v175 = vpop.f32.mrf.mxu0
    %176 = vdwg.mxu0
    %v177 = vmax.f32 %v163, 0.0
    %v178 = vmax.f32 %v166, 0.0
    %v179 = vmax.f32 %v171, 0.0
    %v180 = vmax.f32 %v174, 0.0
    %v181 = vpack.c.bf16 %v178, %v177
    %v182 = vpack.c.bf16 %v180, %v179
    %v185 = vunpack.c.l.b16 %v181
    %v186 = vunpack.c.h.b16 %v181
    %v187 = vunpack.c.l.b16 %v182
    %v188 = vunpack.c.h.b16 %v182
    %v189 = vpack.c.b16 %v185, %v185
    %v190 = vpack.c.b16 %v186, %v186
    %v191 = vpack.c.b16 %v187, %v187
    %v192 = vpack.c.b16 %v188, %v188
    %197 = vst [vmem:[%s3] sm:$0xf] %v189
    %198 = vst [vmem:[%s3 + $0x4] sm:$0xf] %v190
    %199 = vst [vmem:[%s3 + $0x8] sm:$0xf] %v191
    %200 = vst [vmem:[%s3 + $0xc] sm:$0xf] %v192
    // Predicated region
    $region22: #{fsmn_net_forward.3} parent=1 // pred_check
      _
    $region23: #{fsmn_net_forward.3} parent=1 // pred_check_branch
      %202 = sbr.rel (0) target = $region25
    $region24: #{fsmn_net_forward.3} parent=1 // pred_region
      _
    $region25: #{fsmn_net_forward.3} parent=1 // pred_fallthru
      _
    // Predicated region
    $region26: #{fsmn_net_forward.3} parent=1 // pred_check
      _
    $region27: #{fsmn_net_forward.3} parent=1 // pred_check_branch
      %204 = sbr.rel (0) target = $region29
    $region28: #{fsmn_net_forward.3} parent=1 // pred_region
      _
    $region29: #{fsmn_net_forward.3} parent=1 // pred_fallthru
      _
    %205 = vsyncpa [#allocation3], 1
    %206 = vsyncpa [#allocation5], 1

// kernel: fsmn_net_forward.5
$region0: #{fsmn_net_forward.5}
  #allocation0 [shape = 'u32[]', space=smem, size = 0x4, offset = 0x4, fixed_abs, tag = 'smem constant byte address 0x4 - core index']
  #allocation1 [shape = 'u32[144,128]{1,0:T(1,128)}', space=vmem, size = 0x12000, scoped, tag = 'internal scratch']
  %s0 = inlined_call_operand.vmem [shape: bf16[32,128], index: 0, kind: input, shape index: {}]
  %s1 = inlined_call_operand.vmem [shape: bf16[128,128], index: 1, kind: input, shape index: {}]
  %s2 = inlined_call_operand.vmem [shape: f32[1,128], index: 2, kind: input, shape index: {}]
  %s3 = inlined_call_operand.vmem [shape: f32[32,128], index: 3, kind: output, shape index: {}]
  %s4 = sld [smem:[#allocation0]]
  $region22: #{fsmn_net_forward.5} parent=0
    _
  %s6 = ssub.s32 1, %s4
  %s7 = scalar_select 0, %s6, %s4
  // Predicated region
  $region2: #{fsmn_net_forward.5} parent=0 // pred_check
    _
  $region3: #{fsmn_net_forward.5} parent=0 // pred_check_branch
    %9 = sbr.rel (0) target = $region5
  $region4: #{fsmn_net_forward.5} parent=0 // pred_region
    _
  $region5: #{fsmn_net_forward.5} parent=0 // pred_fallthru
    _
  // Predicated region
  $region6: #{fsmn_net_forward.5} parent=0 // pred_check
    _
  $region7: #{fsmn_net_forward.5} parent=0 // pred_check_branch
    %11 = sbr.rel (0) target = $region9
  $region8: #{fsmn_net_forward.5} parent=0 // pred_region
    _
  $region9: #{fsmn_net_forward.5} parent=0 // pred_fallthru
    _
  // Predicated region
  $region10: #{fsmn_net_forward.5} parent=0 // pred_check
    _
  $region11: #{fsmn_net_forward.5} parent=0 // pred_check_branch
    %13 = sbr.rel (0) target = $region13
  $region12: #{fsmn_net_forward.5} parent=0 // pred_region
    _
  $region13: #{fsmn_net_forward.5} parent=0 // pred_fallthru
    _
  %v15 = vld [vmem:[%s0] sm:$0xf]
  %v16 = vld [vmem:[%s0 + $0x4] sm:$0xf]
  %v17 = vld [vmem:[%s0 + $0x8] sm:$0xf]
  %v18 = vld [vmem:[%s0 + $0xc] sm:$0xf]
  %v19 = vld [vmem:[%s1] sm:$0xf]
  %v20 = vld [vmem:[%s1 + $0x4] sm:$0xf]
  %v21 = vld [vmem:[%s1 + $0x8] sm:$0xf]
  %v22 = vld [vmem:[%s1 + $0xc] sm:$0xf]
  %v23 = vld [vmem:[%s1 + $0x10] sm:$0xf]
  %v24 = vld [vmem:[%s1 + $0x14] sm:$0xf]
  %v25 = vld [vmem:[%s1 + $0x18] sm:$0xf]
  %v26 = vld [vmem:[%s1 + $0x1c] sm:$0xf]
  %v27 = vld [vmem:[%s1 + $0x20] sm:$0xf]
  %v28 = vld [vmem:[%s1 + $0x24] sm:$0xf]
  %v29 = vld [vmem:[%s1 + $0x28] sm:$0xf]
  %v30 = vld [vmem:[%s1 + $0x2c] sm:$0xf]
  %v31 = vld [vmem:[%s1 + $0x30] sm:$0xf]
  %v32 = vld [vmem:[%s1 + $0x34] sm:$0xf]
  %v33 = vld [vmem:[%s1 + $0x38] sm:$0xf]
  %v34 = vld [vmem:[%s1 + $0x3c] sm:$0xf]
  %v35 = vld [vmem:[%s2] sm:$0x1]
  %v37 = vlaneseq
  %v38 = vshrl.u32 %v37, 7
  %v39 = vsub.s32 0, %v38
  %v40 = vrot.slane %v35, %v39
  %v46 = vunpack.c.l.b16 %v15
  %v47 = vunpack.c.l.b16 %v16
  %v48 = vunpack.c.l.b16 %v17
  %v49 = vunpack.c.l.b16 %v18
  %v50 = vpack.c.b16 %v47, %v46
  %v51 = vpack.c.b16 %v49, %v48
  %v70 = vunpack.c.l.b16 %v19
  %v71 = vunpack.c.l.b16 %v20
  %v72 = vunpack.c.l.b16 %v21
  %v73 = vunpack.c.l.b16 %v22
  %v74 = vunpack.c.l.b16 %v23
  %v75 = vunpack.c.l.b16 %v24
  %v76 = vunpack.c.l.b16 %v25
  %v77 = vunpack.c.l.b16 %v26
  %v78 = vunpack.c.l.b16 %v27
  %v79 = vunpack.c.l.b16 %v28
  %v80 = vunpack.c.l.b16 %v29
  %v81 = vunpack.c.l.b16 %v30
  %v82 = vunpack.c.l.b16 %v31
  %v83 = vunpack.c.l.b16 %v32
  %v84 = vunpack.c.l.b16 %v33
  %v85 = vunpack.c.l.b16 %v34
  %v86 = vpack.c.b16 %v71, %v70
  %v87 = vpack.c.b16 %v73, %v72
  %v88 = vpack.c.b16 %v75, %v74
  %v89 = vpack.c.b16 %v77, %v76
  %v90 = vpack.c.b16 %v79, %v78
  %v91 = vpack.c.b16 %v81, %v80
  %v92 = vpack.c.b16 %v83, %v82
  %v93 = vpack.c.b16 %v85, %v84
  %102 = vmatprep.subr.bf16.mxu0 0
  %103 = vmatpush1.bf16.msra.mxu0 %v93
  %104 = vmatprep.subr.bf16.mxu0 0
  %105 = vmatpush1.bf16.msra.mxu0 %v92
  %106 = vmatprep.subr.bf16.mxu0 0
  %107 = vmatpush1.bf16.msra.mxu0 %v91
  %108 = vmatprep.subr.bf16.mxu0 0
  %109 = vmatpush1.bf16.msra.mxu0 %v90
  %110 = vmatprep.subr.bf16.mxu0 0
  %111 = vmatpush1.bf16.msra.mxu0 %v89
  %112 = vmatprep.subr.bf16.mxu0 0
  %113 = vmatpush1.bf16.msra.mxu0 %v88
  %114 = vmatprep.subr.bf16.mxu0 0
  %115 = vmatpush1.bf16.msra.mxu0 %v87
  %116 = vmatprep.subr.bf16.mxu0 0
  %117 = vmatpush1.bf16.msra.mxu0 %v86
  %118 = vmatprep.subr.bf16.mxu0 0
  %119 = vmatpush2.bf16.msra.mxu0 0
  %120 = vmatprep.subr.bf16.mxu0 0
  %121 = vmatpush2.bf16.msra.mxu0 0
  %122 = vmatprep.subr.bf16.mxu0 0
  %123 = vmatpush2.bf16.msra.mxu0 0
  %124 = vmatprep.subr.bf16.mxu0 0
  %125 = vmatpush2.bf16.msra.mxu0 0
  %126 = vmatprep.subr.bf16.mxu0 0
  %127 = vmatpush2.bf16.msra.mxu0 0
  %128 = vmatprep.subr.bf16.mxu0 0
  %129 = vmatpush2.bf16.msra.mxu0 0
  %130 = vmatprep.subr.bf16.mxu0 0
  %131 = vmatpush2.bf16.msra.mxu0 0
  %132 = vmatprep.subr.bf16.mxu0 0
  %133 = vmatpush2.bf16.msra.mxu0 0
  %134 = vmatprep.mubr.bf16.mxu0 0
  %135 = vmatmul.mubr.bf16.gmra.mxu0 %v50
  %v136 = vpop.f32.mrf.mxu0
  %v137 = vadd.f32 %v40, %v136
  %v138 = vpop.f32.mrf.mxu0
  %v139 = vpop.f32.mrf.mxu0
  %v140 = vadd.f32 %v40, %v139
  %v141 = vpop.f32.mrf.mxu0
  %142 = vmatprep.mubr.bf16.mxu0 0
  %143 = vmatmul.mubr.bf16.gmra.mxu0 %v51
  %v144 = vpop.f32.mrf.mxu0
  %v145 = vadd.f32 %v40, %v144
  %v146 = vpop.f32.mrf.mxu0
  %v147 = vpop.f32.mrf.mxu0
  %v148 = vadd.f32 %v40, %v147
  %v149 = vpop.f32.mrf.mxu0
  %150 = vdwg.mxu0
  %151 = vst [vmem:[%s3] sm:$0xff] %v137
  %152 = vst [vmem:[%s3 + $0x8] sm:$0xff] %v140
  %153 = vst [vmem:[%s3 + $0x10] sm:$0xff] %v145
  %154 = vst [vmem:[%s3 + $0x18] sm:$0xff] %v148
  // Predicated region
  $region14: #{fsmn_net_forward.5} parent=0 // pred_check
    _
  $region15: #{fsmn_net_forward.5} parent=0 // pred_check_branch
    %156 = sbr.rel (0) target = $region17
  $region16: #{fsmn_net_forward.5} parent=0 // pred_region
    _
  $region17: #{fsmn_net_forward.5} parent=0 // pred_fallthru
    _
  // Predicated region
  $region18: #{fsmn_net_forward.5} parent=0 // pred_check
    _
  $region19: #{fsmn_net_forward.5} parent=0 // pred_check_branch
    %158 = sbr.rel (0) target = $region21
  $region20: #{fsmn_net_forward.5} parent=0 // pred_region
    _
  $region21: #{fsmn_net_forward.5} parent=0 // pred_fallthru
    _

// kernel: fsmn_net_forward.4
$region0: #{fsmn_net_forward.4}
  #allocation0 [shape = 'u32[]', space=smem, size = 0x4, offset = 0x4, fixed_abs, tag = 'smem constant byte address 0x4 - core index']
  #allocation1 [shape = 'u32[144,128]{1,0:T(1,128)}', space=vmem, size = 0x12000, scoped, tag = 'internal scratch']
  #allocation2 [shape = 'bf16[16,128]{1,0:T(8,128)(2,1)}', space=vmem, size = 0x1000, scoped, tag = 'scratch operand']
  #allocation3 [shape = 'f32[32,128]{1,0:T(8,128)}', space=vmem, size = 0x4000, scoped, tag = 'scratch operand']
  %s0 = inlined_call_operand.vmem [shape: bf16[2,16,128], index: 0, kind: input, shape index: {}]
  %s1 = inlined_call_operand.vmem [shape: bf16[2,128,128], index: 1, kind: input, shape index: {}]
  %s2 = inlined_call_operand.vmem [shape: f32[2,3,128], index: 2, kind: input, shape index: {}]
  %s3 = inlined_call_operand.vmem [shape: f32[2,1,128], index: 3, kind: input, shape index: {}]
  %s4 = inlined_call_operand.hbm [shape: bf16[2,128,128], index: 4, kind: input, shape index: {}]
  %s5 = inlined_call_operand.vmem [shape: f32[2,1,128], index: 5, kind: input, shape index: {}]
  %s6 = inlined_call_operand.vmem [shape: bf16[2,16,128], index: 6, kind: output, shape index: {}]
  %s7 = sld [smem:[#allocation0]]
  $region69: #{fsmn_net_forward.4} parent=0
    _
  %s9 = ssub.s32 1, %s7
  %s10 = scalar_select 0, %s9, %s7
  $region1: #{fsmn_net_forward.4} parent=0
    #allocation4 [shape = 'u8[65536]{0}', space=vmem, size = 0x10000, scoped, tag = 'input window, operand 4']
    #allocation5 [shape = 's32[2]{0}', space=sflag, size = 0x8, scoped, tag = 'scoped memory for fsmn_net_forward.4']
    %11 = vsyncpa [#allocation5], 0
    %s12 = scalar_lea.sflag [#allocation5], 1
    %13 = vsyncpa %s12, 0
    loop: start=0, step=1, limit=6
    $region2: #{fsmn_net_forward.4} parent=1 // loop_pre_header
      _
    $region3: #{fsmn_net_forward.4} parent=1 // loop_header
      %s15 = sphi 0, %s19
      %p16 = scmp.ge.s32.totalorder %s15, 6
      %s22 = sphi 0, %s34
      %s23 = sphi 0, %s30
      %s24 = sphi 0, %s22
      %s25 = sphi 0, %s23
      %s26 = sphi 0, %s24
      %s27 = sphi 0, %s25
      %s37 = sphi 0, %s39
      %s40 = sphi 0, %s37
      %s41 = sphi 0, %s40
      %s57 = sphi 0, %s41
      %s63 = sphi 0, %s65
      %s66 = sphi 0, %s63
      %s67 = sphi 0, %s66
      %s83 = sphi 0, %s67
      %s89 = sphi 0, %s91
      %s92 = sphi 0, %s89
      %s93 = sphi 0, %s92
      %s109 = sphi 0, %s93
      %s115 = sphi 0, %s117
      %s118 = sphi 0, %s115
      %s119 = sphi 0, %s118
      %s135 = sphi 0, %s119
      %s141 = sphi 0, %s143
      %s144 = sphi 0, %s141
      %s145 = sphi 0, %s144
      %s161 = sphi 0, %s145
      %s167 = sphi 0, %s169
      %s170 = sphi 0, %s167
      %s171 = sphi 0, %s170
      %s187 = sphi 0, %s171
      %s193 = sphi 0, %s195
      %s196 = sphi 0, %s193
      %s197 = sphi 0, %s196
      %s213 = sphi 0, %s197
    $region4: #{fsmn_net_forward.4} parent=1 // loop_header_branch
      %18 = sbr.rel (%p16) target = $region8
    $region5: #{fsmn_net_forward.4} parent=1 // loop_body
      %s20 = ssub.s32 %s15, 1
      %s21 = ssub.s32 %s15, 2
      %s28 = sadd.s32 1, %s23
      %p29 = scmp.ge.s32.totalorder %s28, 2
      %s30 = scalar_select %p29, 0, %s28
      %s31 = sadd.s32 1, %s22
      %s32 = scalar_select %p29, %s31, %s22
      %p33 = scmp.ge.s32.totalorder %s32, 2
      %s34 = scalar_select %p33, 0, %s32
      %s35 = ssub.s32 %s22, %s34
      %p36 = scmp.eq.s32.totalorder %s35, 0
      %s38 = sadd.s32 %s37, 1
      %s39 = scalar_select %p36, %s37, %s38
      %p42 = pneg %p36
      %p43 = scmp.eq.s32.totalorder %s15, 3
      %p44 = por %p42, %p43
      %p45 = scmp.ne.s32.totalorder %s37, %s40
      %p46 = scmp.eq.s32.totalorder %s15, 0
      %p47 = por %p45, %p46
      %p48 = scmp.ne.s32.totalorder %s37, %s40
      %p49 = scmp.eq.s32.totalorder %s20, 3
      %p50 = por %p48, %p49
      %p51 = scmp.ne.s32.totalorder %s40, %s41
      %p52 = scmp.eq.s32.totalorder %s20, 0
      %p53 = por %p51, %p52
      %p54 = scmp.ne.s32.totalorder %s40, %s41
      %p55 = scmp.eq.s32.totalorder %s21, 3
      %p56 = por %p54, %p55
      %p58 = scmp.ne.s32.totalorder %s41, %s57
      %p59 = scmp.eq.s32.totalorder %s21, 0
      %p60 = por %p58, %p59
      %s61 = ssub.s32 %s23, %s30
      %p62 = scmp.eq.s32.totalorder %s61, 0
      %s64 = sadd.s32 %s63, 1
      %s65 = scalar_select %p62, %s63, %s64
      %p68 = pneg %p62
      %p69 = scmp.eq.s32.totalorder %s15, 3
      %p70 = por %p68, %p69
      %p71 = scmp.ne.s32.totalorder %s63, %s66
      %p72 = scmp.eq.s32.totalorder %s15, 0
      %p73 = por %p71, %p72
      %p74 = scmp.ne.s32.totalorder %s63, %s66
      %p75 = scmp.eq.s32.totalorder %s20, 3
      %p76 = por %p74, %p75
      %p77 = scmp.ne.s32.totalorder %s66, %s67
      %p78 = scmp.eq.s32.totalorder %s20, 0
      %p79 = por %p77, %p78
      %p80 = scmp.ne.s32.totalorder %s66, %s67
      %p81 = scmp.eq.s32.totalorder %s21, 3
      %p82 = por %p80, %p81
      %p84 = scmp.ne.s32.totalorder %s67, %s83
      %p85 = scmp.eq.s32.totalorder %s21, 0
      %p86 = por %p84, %p85
      %s87 = ssub.s32 %s23, %s30
      %p88 = scmp.eq.s32.totalorder %s87, 0
      %s90 = sadd.s32 %s89, 1
      %s91 = scalar_select %p88, %s89, %s90
      %p94 = pneg %p88
      %p95 = scmp.eq.s32.totalorder %s15, 3
      %p96 = por %p94, %p95
      %p97 = scmp.ne.s32.totalorder %s89, %s92
      %p98 = scmp.eq.s32.totalorder %s15, 0
      %p99 = por %p97, %p98
      %p100 = scmp.ne.s32.totalorder %s89, %s92
      %p101 = scmp.eq.s32.totalorder %s20, 3
      %p102 = por %p100, %p101
      %p103 = scmp.ne.s32.totalorder %s92, %s93
      %p104 = scmp.eq.s32.totalorder %s20, 0
      %p105 = por %p103, %p104
      %p106 = scmp.ne.s32.totalorder %s92, %s93
      %p107 = scmp.eq.s32.totalorder %s21, 3
      %p108 = por %p106, %p107
      %p110 = scmp.ne.s32.totalorder %s93, %s109
      %p111 = scmp.eq.s32.totalorder %s21, 0
      %p112 = por %p110, %p111
      %s113 = ssub.s32 %s23, %s30
      %p114 = scmp.eq.s32.totalorder %s113, 0
      %s116 = sadd.s32 %s115, 1
      %s117 = scalar_select %p114, %s115, %s116
      %p120 = pneg %p114
      %p121 = scmp.eq.s32.totalorder %s15, 3
      %p122 = por %p120, %p121
      %p123 = scmp.ne.s32.totalorder %s115, %s118
      %p124 = scmp.eq.s32.totalorder %s15, 0
      %p125 = por %p123, %p124
      %p126 = scmp.ne.s32.totalorder %s115, %s118
      %p127 = scmp.eq.s32.totalorder %s20, 3
      %p128 = por %p126, %p127
      %p129 = scmp.ne.s32.totalorder %s118, %s119
      %p130 = scmp.eq.s32.totalorder %s20, 0
      %p131 = por %p129, %p130
      %p132 = scmp.ne.s32.totalorder %s118, %s119
      %p133 = scmp.eq.s32.totalorder %s21, 3
      %p134 = por %p132, %p133
      %p136 = scmp.ne.s32.totalorder %s119, %s135
      %p137 = scmp.eq.s32.totalorder %s21, 0
      %p138 = por %p136, %p137
      %s139 = ssub.s32 %s23, %s30
      %p140 = scmp.eq.s32.totalorder %s139, 0
      %s142 = sadd.s32 %s141, 1
      %s143 = scalar_select %p140, %s141, %s142
      %p146 = pneg %p140
      %p147 = scmp.eq.s32.totalorder %s15, 3
      %p148 = por %p146, %p147
      %p149 = scmp.ne.s32.totalorder %s141, %s144
      %p150 = scmp.eq.s32.totalorder %s15, 0
      %p151 = por %p149, %p150
      %p152 = scmp.ne.s32.totalorder %s141, %s144
      %p153 = scmp.eq.s32.totalorder %s20, 3
      %p154 = por %p152, %p153
      %p155 = scmp.ne.s32.totalorder %s144, %s145
      %p156 = scmp.eq.s32.totalorder %s20, 0
      %p157 = por %p155, %p156
      %p158 = scmp.ne.s32.totalorder %s144, %s145
      %p159 = scmp.eq.s32.totalorder %s21, 3
      %p160 = por %p158, %p159
      %p162 = scmp.ne.s32.totalorder %s145, %s161
      %p163 = scmp.eq.s32.totalorder %s21, 0
      %p164 = por %p162, %p163
      %s165 = ssub.s32 %s23, %s30
      %p166 = scmp.eq.s32.totalorder %s165, 0
      %s168 = sadd.s32 %s167, 1
      %s169 = scalar_select %p166, %s167, %s168
      %p172 = pneg %p166
      %p173 = scmp.eq.s32.totalorder %s15, 3
      %p174 = por %p172, %p173
      %p175 = scmp.ne.s32.totalorder %s167, %s170
      %p176 = scmp.eq.s32.totalorder %s15, 0
      %p177 = por %p175, %p176
      %p178 = scmp.ne.s32.totalorder %s167, %s170
      %p179 = scmp.eq.s32.totalorder %s20, 3
      %p180 = por %p178, %p179
      %p181 = scmp.ne.s32.totalorder %s170, %s171
      %p182 = scmp.eq.s32.totalorder %s20, 0
      %p183 = por %p181, %p182
      %p184 = scmp.ne.s32.totalorder %s170, %s171
      %p185 = scmp.eq.s32.totalorder %s21, 3
      %p186 = por %p184, %p185
      %p188 = scmp.ne.s32.totalorder %s171, %s187
      %p189 = scmp.eq.s32.totalorder %s21, 0
      %p190 = por %p188, %p189
      %s191 = ssub.s32 %s22, %s34
      %p192 = scmp.eq.s32.totalorder %s191, 0
      %s194 = sadd.s32 %s193, 1
      %s195 = scalar_select %p192, %s193, %s194
      %p198 = pneg %p192
      %p199 = scmp.eq.s32.totalorder %s15, 3
      %p200 = por %p198, %p199
      %p201 = scmp.ne.s32.totalorder %s193, %s196
      %p202 = scmp.eq.s32.totalorder %s15, 0
      %p203 = por %p201, %p202
      %p204 = scmp.ne.s32.totalorder %s193, %s196
      %p205 = scmp.eq.s32.totalorder %s20, 3
      %p206 = por %p204, %p205
      %p207 = scmp.ne.s32.totalorder %s196, %s197
      %p208 = scmp.eq.s32.totalorder %s20, 0
      %p209 = por %p207, %p208
      %p210 = scmp.ne.s32.totalorder %s196, %s197
      %p211 = scmp.eq.s32.totalorder %s21, 3
      %p212 = por %p210, %p211
      %p214 = scmp.ne.s32.totalorder %s197, %s213
      %p215 = scmp.eq.s32.totalorder %s21, 0
      %p216 = por %p214, %p215
      %p217 = scmp.le.s32.totalorder 1, %s15
      %p218 = scmp.lt.s32.totalorder %s15, 5
      %p219 = pnand %p217, %p218
      %p220 = pneg %p219
      // Predicated region
      $region9: #{fsmn_net_forward.4} parent=5 // pred_check
        _
      $region10: #{fsmn_net_forward.4} parent=5 // pred_check_branch
        %222 = sbr.rel (%p219) target = $region12
      $region11: #{fsmn_net_forward.4} parent=5 // pred_region
        %s223 = ssub.s32 %s15, 1
      $region12: #{fsmn_net_forward.4} parent=5 // pred_fallthru
        _
      %p224 = scmp.lt.s32.totalorder %s15, 4
      // Predicated region
      $region13: #{fsmn_net_forward.4} parent=5 // pred_check
        %p225 = pneg %p224
      $region14: #{fsmn_net_forward.4} parent=5 // pred_check_branch
        %227 = sbr.rel (%p225) target = $region16
      $region15: #{fsmn_net_forward.4} parent=5 // pred_region
        // Predicated region
        $region17: #{fsmn_net_forward.4} parent=15 // pred_check
          %p228 = pneg %p47
        $region18: #{fsmn_net_forward.4} parent=15 // pred_check_branch
          %230 = sbr.rel (%p228) target = $region20
        $region19: #{fsmn_net_forward.4} parent=15 // pred_region
          %p231 = scmp.lt.s32.totalorder %s22, 1
          %s232 = scalar_select %p231, %s22, 1
          %s233 = smul.addr %s232, 2
          %s234 = smul.addr %s233, 4
          %s235 = scalar_lea.vmem %s0, %s234
        $region20: #{fsmn_net_forward.4} parent=15 // pred_fallthru
          _
        // Predicated region
        $region21: #{fsmn_net_forward.4} parent=15 // pred_check
          %p236 = pneg %p73
        $region22: #{fsmn_net_forward.4} parent=15 // pred_check_branch
          %238 = sbr.rel (%p236) target = $region24
        $region23: #{fsmn_net_forward.4} parent=15 // pred_region
          %p239 = scmp.lt.s32.totalorder %s23, 1
          %s240 = scalar_select %p239, %s23, 1
          %s241 = smul.addr %s240, 16
          %s242 = smul.addr %s241, 4
          %s243 = scalar_lea.vmem %s1, %s242
        $region24: #{fsmn_net_forward.4} parent=15 // pred_fallthru
          _
        // Predicated region
        $region25: #{fsmn_net_forward.4} parent=15 // pred_check
          %p244 = pneg %p99
        $region26: #{fsmn_net_forward.4} parent=15 // pred_check_branch
          %246 = sbr.rel (%p244) target = $region28
        $region27: #{fsmn_net_forward.4} parent=15 // pred_region
          %p247 = scmp.lt.s32.totalorder %s23, 1
          %s248 = scalar_select %p247, %s23, 1
          %s249 = smul.addr %s248, 4
          %s250 = scalar_lea.vmem %s2, %s249
        $region28: #{fsmn_net_forward.4} parent=15 // pred_fallthru
          _
        // Predicated region
        $region29: #{fsmn_net_forward.4} parent=15 // pred_check
          %p251 = pneg %p125
        $region30: #{fsmn_net_forward.4} parent=15 // pred_check_branch
          %253 = sbr.rel (%p251) target = $region32
        $region31: #{fsmn_net_forward.4} parent=15 // pred_region
          %p254 = scmp.lt.s32.totalorder %s23, 1
          %s255 = scalar_select %p254, %s23, 1
          %s256 = scalar_lea.vmem %s3, %s255
        $region32: #{fsmn_net_forward.4} parent=15 // pred_fallthru
          _
        // Predicated region
        $region33: #{fsmn_net_forward.4} parent=15 // pred_check
          %p257 = pneg %p151
        $region34: #{fsmn_net_forward.4} parent=15 // pred_check_branch
          %259 = sbr.rel (%p257) target = $region36
        $region35: #{fsmn_net_forward.4} parent=15 // pred_region
          %s260 = sand.u32 %s141, 1
          %s261 = scalar_lea.sflag [#allocation5], %s260
          %s262 = sand.u32 %s141, 1
          %s263 = smul.addr %s262, 64
          %s264 = scalar_lea.vmem [#allocation4], %s263
          %s266 = ssub.s32 1024, 1024
          %267 = vsyncadd %s261, %s266
          %s268 = smul.addr %s23, 16
          %s269 = smul.addr %s268, 64
          %s270 = scalar_lea.hbm %s4, %s269
          %s271 = sshll.u32 %s264, 4
          %s272 = int_to_ptr.vmem [resolvable:$true] %s271
          %277 = dma.hbm_to_vmem [thread:$0]  %s270, 1024, %s272, %s261, 64, 64, 4
        $region36: #{fsmn_net_forward.4} parent=15 // pred_fallthru
          _
        // Predicated region
        $region37: #{fsmn_net_forward.4} parent=15 // pred_check
          %p278 = pneg %p177
        $region38: #{fsmn_net_forward.4} parent=15 // pred_check_branch
          %280 = sbr.rel (%p278) target = $region40
        $region39: #{fsmn_net_forward.4} parent=15 // pred_region
          %p281 = scmp.lt.s32.totalorder %s23, 1
          %s282 = scalar_select %p281, %s23, 1
          %s283 = scalar_lea.vmem %s5, %s282
        $region40: #{fsmn_net_forward.4} parent=15 // pred_fallthru
          _
      $region16: #{fsmn_net_forward.4} parent=5 // pred_fallthru
        _
      %p284 = scmp.le.s32.totalorder 1, %s15
      %p285 = scmp.lt.s32.totalorder %s15, 5
      %p286 = pnand %p284, %p285
      %p287 = pneg %p286
      // Predicated region
      $region41: #{fsmn_net_forward.4} parent=5 // pred_check
        _
      $region42: #{fsmn_net_forward.4} parent=5 // pred_check_branch
        %289 = sbr.rel (%p286) target = $region44
      $region43: #{fsmn_net_forward.4} parent=5 // pred_region
        %s290 = ssub.s32 %s15, 1
        %s291 = sand.u32 %s144, 1
        %s292 = scalar_lea.sflag [#allocation5], %s291
        %s293 = sand.u32 %s144, 1
        %s294 = smul.addr %s293, 64
        %s295 = scalar_lea.vmem [#allocation4], %s294
        // Predicated region
        $region45: #{fsmn_net_forward.4} parent=43 // pred_check
          %p296 = pneg %p157
        $region46: #{fsmn_net_forward.4} parent=43 // pred_check_branch
          %298 = sbr.rel (%p296) target = $region48
        $region47: #{fsmn_net_forward.4} parent=43 // pred_region
          %299 = dma.done %s292, 1024
        $region48: #{fsmn_net_forward.4} parent=43 // pred_fallthru
          _
        %p300 = scmp.lt.s32.totalorder %s24, 1
        %s301 = scalar_select %p300, %s24, 1
        %s302 = smul.addr %s301, 2
        %s303 = smul.addr %s302, 4
        %s304 = scalar_lea.vmem %s0, %s303
        %p305 = pneg %p53
        %p306 = pneg %p50
        %p307 = scmp.lt.s32.totalorder %s25, 1
        %s308 = scalar_select %p307, %s25, 1
        %s309 = smul.addr %s308, 16
        %s310 = smul.addr %s309, 4
        %s311 = scalar_lea.vmem %s1, %s310
        %p312 = pneg %p79
        %p313 = pneg %p76
        %p314 = scmp.lt.s32.totalorder %s25, 1
        %s315 = scalar_select %p314, %s25, 1
        %s316 = smul.addr %s315, 4
        %s317 = scalar_lea.vmem %s2, %s316
        %p318 = pneg %p105
        %p319 = pneg %p102
        %p320 = scmp.lt.s32.totalorder %s25, 1
        %s321 = scalar_select %p320, %s25, 1
        %s322 = scalar_lea.vmem %s3, %s321
        %p323 = pneg %p131
        %p324 = pneg %p128
        %s325 = sand.u32 %s144, 1
        %s326 = scalar_lea.sflag [#allocation5], %s325
        %s327 = sand.u32 %s144, 1
        %s328 = smul.addr %s327, 64
        %s329 = scalar_lea.vmem [#allocation4], %s328
        %p330 = pneg %p157
        %p331 = pneg %p154
        %p332 = scmp.lt.s32.totalorder %s25, 1
        %s333 = scalar_select %p332, %s25, 1
        %s334 = scalar_lea.vmem %s5, %s333
        %p335 = pneg %p183
        %p336 = pneg %p180
        %p337 = pneg %p209
        %p338 = pneg %p206
        %p339 = scmp.lt.s32.totalorder %s24, 1
        %s340 = scalar_select %p339, %s24, 1
        %s341 = smul.addr %s340, 2
        %s342 = smul.addr %s341, 4
        %s343 = scalar_lea.vmem %s6, %s342
        %p344 = scmp.lt.s32.totalorder %s24, 1
        %s345 = scalar_select %p344, %s24, 1
        %s346 = smul.addr %s345, 2
        %s347 = smul.addr %s346, 4
        %s348 = scalar_lea.vmem %s0, %s347
        %p349 = scmp.lt.s32.totalorder %s25, 1
        %s350 = scalar_select %p349, %s25, 1
        %s351 = smul.addr %s350, 16
        %s352 = smul.addr %s351, 4
        %s353 = scalar_lea.vmem %s1, %s352
        %p354 = scmp.lt.s32.totalorder %s25, 1
        %s355 = scalar_select %p354, %s25, 1
        %s356 = smul.addr %s355, 4
        %s357 = scalar_lea.vmem %s2, %s356
        %p358 = scmp.lt.s32.totalorder %s25, 1
        %s359 = scalar_select %p358, %s25, 1
        %s360 = scalar_lea.vmem %s3, %s359
        %p361 = scmp.lt.s32.totalorder %s25, 1
        %s362 = scalar_select %p361, %s25, 1
        %s363 = scalar_lea.vmem %s5, %s362
        %p364 = scmp.lt.s32.totalorder %s24, 1
        %s365 = scalar_select %p364, %s24, 1
        %s366 = smul.addr %s365, 2
        %s367 = smul.addr %s366, 4
        %s368 = scalar_lea.vmem %s6, %s367
        %p370 = scmp.eq.s32.totalorder %s25, 0
        // Predicated region
        $region49: #{fsmn_net_forward.4} parent=43 // pred_check
          %p371 = pneg %p370
        $region50: #{fsmn_net_forward.4} parent=43 // pred_check_branch
          %373 = sbr.rel (%p371) target = $region52
        $region51: #{fsmn_net_forward.4} parent=43 // pred_region
          %v374 = vld [vmem:[%s348] sm:$0xf]
          %v375 = vld [vmem:[%s348 + $0x4] sm:$0xf]
          %376 = vst [vmem:[#allocation2] sm:$0xf] %v374
          %377 = vst [vmem:[#allocation2 + $0x4] sm:$0xf] %v375
        $region52: #{fsmn_net_forward.4} parent=43 // pred_fallthru
          _
        %v378 = vld [vmem:[#allocation2] sm:$0xf]
        %v379 = vld [vmem:[#allocation2 + $0x4] sm:$0xf]
        %v380 = vld [vmem:[%s353] sm:$0xf]
        %v381 = vld [vmem:[%s353 + $0x4] sm:$0xf]
        %v382 = vld [vmem:[%s353 + $0x8] sm:$0xf]
        %v383 = vld [vmem:[%s353 + $0xc] sm:$0xf]
        %v384 = vld [vmem:[%s353 + $0x10] sm:$0xf]
        %v385 = vld [vmem:[%s353 + $0x14] sm:$0xf]
        %v386 = vld [vmem:[%s353 + $0x18] sm:$0xf]
        %v387 = vld [vmem:[%s353 + $0x1c] sm:$0xf]
        %v388 = vld [vmem:[%s353 + $0x20] sm:$0xf]
        %v389 = vld [vmem:[%s353 + $0x24] sm:$0xf]
        %v390 = vld [vmem:[%s353 + $0x28] sm:$0xf]
        %v391 = vld [vmem:[%s353 + $0x2c] sm:$0xf]
        %v392 = vld [vmem:[%s353 + $0x30] sm:$0xf]
        %v393 = vld [vmem:[%s353 + $0x34] sm:$0xf]
        %v394 = vld [vmem:[%s353 + $0x38] sm:$0xf]
        %v395 = vld [vmem:[%s353 + $0x3c] sm:$0xf]
        %v398 = vunpack.c.l.b16 %v378
        %v399 = vunpack.c.l.b16 %v379
        %v400 = vpack.c.b16 %v399, %v398
        %v418 = vunpack.c.l.b16 %v380
        %v419 = vunpack.c.l.b16 %v381
        %v420 = vunpack.c.l.b16 %v382
        %v421 = vunpack.c.l.b16 %v383
        %v422 = vunpack.c.l.b16 %v384
        %v423 = vunpack.c.l.b16 %v385
        %v424 = vunpack.c.l.b16 %v386
        %v425 = vunpack.c.l.b16 %v387
        %v426 = vunpack.c.l.b16 %v388
        %v427 = vunpack.c.l.b16 %v389
        %v428 = vunpack.c.l.b16 %v390
        %v429 = vunpack.c.l.b16 %v391
        %v430 = vunpack.c.l.b16 %v392
        %v431 = vunpack.c.l.b16 %v393
        %v432 = vunpack.c.l.b16 %v394
        %v433 = vunpack.c.l.b16 %v395
        %v434 = vpack.c.b16 %v419, %v418
        %v435 = vpack.c.b16 %v421, %v420
        %v436 = vpack.c.b16 %v423, %v422
        %v437 = vpack.c.b16 %v425, %v424
        %v438 = vpack.c.b16 %v427, %v426
        %v439 = vpack.c.b16 %v429, %v428
        %v440 = vpack.c.b16 %v431, %v430
        %v441 = vpack.c.b16 %v433, %v432
        %450 = vmatprep.subr.bf16.mxu0 0
        %451 = vmatpush1.bf16.msra.mxu0 %v441
        %452 = vmatprep.subr.bf16.mxu0 0
        %453 = vmatpush1.bf16.msra.mxu0 %v440
        %454 = vmatprep.subr.bf16.mxu0 0
        %455 = vmatpush1.bf16.msra.mxu0 %v439
        %456 = vmatprep.subr.bf16.mxu0 0
        %457 = vmatpush1.bf16.msra.mxu0 %v438
        %458 = vmatprep.subr.bf16.mxu0 0
        %459 = vmatpush1.bf16.msra.mxu0 %v437
        %460 = vmatprep.subr.bf16.mxu0 0
        %461 = vmatpush1.bf16.msra.mxu0 %v436
        %462 = vmatprep.subr.bf16.mxu0 0
        %463 = vmatpush1.bf16.msra.mxu0 %v435
        %464 = vmatprep.subr.bf16.mxu0 0
        %465 = vmatpush1.bf16.msra.mxu0 %v434
        %466 = vmatprep.subr.bf16.mxu0 0
        %467 = vmatpush2.bf16.msra.mxu0 0
        %468 = vmatprep.subr.bf16.mxu0 0
        %469 = vmatpush2.bf16.msra.mxu0 0
        %470 = vmatprep.subr.bf16.mxu0 0
        %471 = vmatpush2.bf16.msra.mxu0 0
        %472 = vmatprep.subr.bf16.mxu0 0
        %473 = vmatpush2.bf16.msra.mxu0 0
        %474 = vmatprep.subr.bf16.mxu0 0
        %475 = vmatpush2.bf16.msra.mxu0 0
        %476 = vmatprep.subr.bf16.mxu0 0
        %477 = vmatpush2.bf16.msra.mxu0 0
        %478 = vmatprep.subr.bf16.mxu0 0
        %479 = vmatpush2.bf16.msra.mxu0 0
        %480 = vmatprep.subr.bf16.mxu0 0
        %481 = vmatpush2.bf16.msra.mxu0 0
        %482 = vmatprep.mubr.bf16.mxu0 0
        %483 = vmatmul.mubr.bf16.gmra.mxu0 %v400
        %v484 = vpop.f32.mrf.mxu0
        %v485 = vadd.f32 0.0, %v484
        %v486 = vpop.f32.mrf.mxu0
        %v487 = vpop.f32.mrf.mxu0
        %v488 = vadd.f32 0.0, %v487
        %v489 = vpop.f32.mrf.mxu0
        %490 = vdwg.mxu0
        %491 = vst [vmem:[#allocation3] sm:$0xff] 0.0
        %492 = vst [vmem:[#allocation3 + $0x18] sm:$0xff] 0.0
        %493 = vst [vmem:[#allocation3 + $0x8] sm:$0xff] %v485
        %494 = vst [vmem:[#allocation3 + $0x10] sm:$0xff] %v488
        %v495 = vld [vmem:[#allocation3] sm:$0xff]
        %v496 = vld [vmem:[#allocation3 + $0x8] sm:$0xff]
        %v497 = vld [vmem:[#allocation3 + $0x10] sm:$0xff]
        %v498 = vld [vmem:[#allocation3 + $0x18] sm:$0xff]
        %v499 = vld [vmem:[%s357] sm:$0x7]
        %v500 = vlaneseq
        %v501 = vshrl.u32 %v500, 7
        %v502 = vsub.s32 0, %v501
        %v503 = vrot.slane %v499, %v502
        %v504 = vmul.f32 %v503, %v495
        %v505 = vmul.f32 %v503, %v496
        %v506 = vmul.f32 %v503, %v497
        %vm510 = vcmask 1041408
        %v511 = vrot.slane %v504, 6
        %v512 = vrot.slane %v505, 6
        %v513 = vsel %vm510, %v511, %v512
        %v514 = vrot.slane %v506, 6
        %v515 = vsel %vm510, %v512, %v514
        %v518 = vadd.f32 %v485, %v513
        %v519 = vadd.f32 %v488, %v515
        %v520 = vlaneseq
        %v521 = vshrl.u32 %v520, 7
        %v522 = vsub.s32 1, %v521
        %v523 = vrot.slane %v499, %v522
        %v524 = vmul.f32 %v523, %v495
        %v525 = vmul.f32 %v523, %v496
        %v526 = vmul.f32 %v523, %v497
        %vm530 = vcmask 1040384
        %v531 = vrot.slane %v524, 7
        %v532 = vrot.slane %v525, 7
        %v533 = vsel %vm530, %v531, %v532
        %v534 = vrot.slane %v526, 7
        %v535 = vsel %vm530, %v532, %v534
        %v538 = vadd.f32 %v518, %v533
        %v539 = vadd.f32 %v519, %v535
        %v540 = vlaneseq
        %v541 = vshrl.u32 %v540, 7
        %v542 = vsub.s32 2, %v541
        %v543 = vrot.slane %v499, %v542
        %v544 = vmul.f32 %v543, %v496
        %v545 = vmul.f32 %v543, %v497
        %v546 = vadd.f32 %v538, %v544
        %v547 = vadd.f32 %v539, %v545
        %v548 = vld [vmem:[%s360] sm:$0x1]
        %v550 = vlaneseq
        %v551 = vshrl.u32 %v550, 7
        %v552 = vsub.s32 0, %v551
        %v553 = vrot.slane %v548, %v552
        %v555 = vmul.f32 %v553, %v496
        %v556 = vmul.f32 %v553, %v497
        %v557 = vmul.f32 %v553, %v498
        %vm561 = vcmask 1046528
        %v562 = vrot.slane %v555, 1
        %v563 = vrot.slane %v556, 1
        %v564 = vsel %vm561, %v562, %v563
        %v565 = vrot.slane %v557, 1
        %v566 = vsel %vm561, %v563, %v565
        %v569 = vadd.f32 %v546, %v564
        %v570 = vadd.f32 %v547, %v566
        %v571 = vpack.c.bf16 %v570, %v569
        %v572 = vld [vmem:[%s295] sm:$0xf]
        %v573 = vld [vmem:[%s295 + $0x4] sm:$0xf]
        %v574 = vld [vmem:[%s295 + $0x8] sm:$0xf]
        %v575 = vld [vmem:[%s295 + $0xc] sm:$0xf]
        %v576 = vld [vmem:[%s295 + $0x10] sm:$0xf]
        %v577 = vld [vmem:[%s295 + $0x14] sm:$0xf]
        %v578 = vld [vmem:[%s295 + $0x18] sm:$0xf]
        %v579 = vld [vmem:[%s295 + $0x1c] sm:$0xf]
        %v580 = vld [vmem:[%s295 + $0x20] sm:$0xf]
        %v581 = vld [vmem:[%s295 + $0x24] sm:$0xf]
        %v582 = vld [vmem:[%s295 + $0x28] sm:$0xf]
        %v583 = vld [vmem:[%s295 + $0x2c] sm:$0xf]
        %v584 = vld [vmem:[%s295 + $0x30] sm:$0xf]
        %v585 = vld [vmem:[%s295 + $0x34] sm:$0xf]
        %v586 = vld [vmem:[%s295 + $0x38] sm:$0xf]
        %v587 = vld [vmem:[%s295 + $0x3c] sm:$0xf]
        %v588 = vld [vmem:[%s363] sm:$0x1]
        %v590 = vlaneseq
        %v591 = vshrl.u32 %v590, 7
        %v592 = vsub.s32 0, %v591
        %v593 = vrot.slane %v588, %v592
        %v611 = vunpack.c.l.b16 %v572
        %v612 = vunpack.c.l.b16 %v573
        %v613 = vunpack.c.l.b16 %v574
        %v614 = vunpack.c.l.b16 %v575
        %v615 = vunpack.c.l.b16 %v576
        %v616 = vunpack.c.l.b16 %v577
        %v617 = vunpack.c.l.b16 %v578
        %v618 = vunpack.c.l.b16 %v579
        %v619 = vunpack.c.l.b16 %v580
        %v620 = vunpack.c.l.b16 %v581
        %v621 = vunpack.c.l.b16 %v582
        %v622 = vunpack.c.l.b16 %v583
        %v623 = vunpack.c.l.b16 %v584
        %v624 = vunpack.c.l.b16 %v585
        %v625 = vunpack.c.l.b16 %v586
        %v626 = vunpack.c.l.b16 %v587
        %v627 = vpack.c.b16 %v612, %v611
        %v628 = vpack.c.b16 %v614, %v613
        %v629 = vpack.c.b16 %v616, %v615
        %v630 = vpack.c.b16 %v618, %v617
        %v631 = vpack.c.b16 %v620, %v619
        %v632 = vpack.c.b16 %v622, %v621
        %v633 = vpack.c.b16 %v624, %v623
        %v634 = vpack.c.b16 %v626, %v625
        %643 = vmatprep.subr.bf16.mxu0 0
        %644 = vmatpush1.bf16.msra.mxu0 %v634
        %645 = vmatprep.subr.bf16.mxu0 0
        %646 = vmatpush1.bf16.msra.mxu0 %v633
        %647 = vmatprep.subr.bf16.mxu0 0
        %648 = vmatpush1.bf16.msra.mxu0 %v632
        %649 = vmatprep.subr.bf16.mxu0 0
        %650 = vmatpush1.bf16.msra.mxu0 %v631
        %651 = vmatprep.subr.bf16.mxu0 0
        %652 = vmatpush1.bf16.msra.mxu0 %v630
        %653 = vmatprep.subr.bf16.mxu0 0
        %654 = vmatpush1.bf16.msra.mxu0 %v629
        %655 = vmatprep.subr.bf16.mxu0 0
        %656 = vmatpush1.bf16.msra.mxu0 %v628
        %657 = vmatprep.subr.bf16.mxu0 0
        %658 = vmatpush1.bf16.msra.mxu0 %v627
        %659 = vmatprep.subr.bf16.mxu0 0
        %660 = vmatpush2.bf16.msra.mxu0 0
        %661 = vmatprep.subr.bf16.mxu0 0
        %662 = vmatpush2.bf16.msra.mxu0 0
        %663 = vmatprep.subr.bf16.mxu0 0
        %664 = vmatpush2.bf16.msra.mxu0 0
        %665 = vmatprep.subr.bf16.mxu0 0
        %666 = vmatpush2.bf16.msra.mxu0 0
        %667 = vmatprep.subr.bf16.mxu0 0
        %668 = vmatpush2.bf16.msra.mxu0 0
        %669 = vmatprep.subr.bf16.mxu0 0
        %670 = vmatpush2.bf16.msra.mxu0 0
        %671 = vmatprep.subr.bf16.mxu0 0
        %672 = vmatpush2.bf16.msra.mxu0 0
        %673 = vmatprep.subr.bf16.mxu0 0
        %674 = vmatpush2.bf16.msra.mxu0 0
        %675 = vmatprep.mubr.bf16.mxu0 0
        %676 = vmatmul.mubr.bf16.gmra.mxu0 %v571
        %v677 = vpop.f32.mrf.mxu0
        %v678 = vadd.f32 %v593, %v677
        %v679 = vpop.f32.mrf.mxu0
        %v680 = vpop.f32.mrf.mxu0
        %v681 = vadd.f32 %v593, %v680
        %v682 = vpop.f32.mrf.mxu0
        %683 = vdwg.mxu0
        %v684 = vmax.f32 %v678, 0.0
        %v685 = vmax.f32 %v681, 0.0
        %v686 = vpack.c.bf16 %v685, %v684
        %v688 = vunpack.c.l.b16 %v686
        %v689 = vunpack.c.h.b16 %v686
        %v690 = vpack.c.b16 %v688, %v688
        %v691 = vpack.c.b16 %v689, %v689
        %694 = vst [vmem:[#allocation2] sm:$0xf] %v690
        %695 = vst [vmem:[#allocation2 + $0x4] sm:$0xf] %v691
        %p696 = scmp.eq.s32.totalorder %s25, 1
        // Predicated region
        $region53: #{fsmn_net_forward.4} parent=43 // pred_check
          %p697 = pneg %p696
        $region54: #{fsmn_net_forward.4} parent=43 // pred_check_branch
          %699 = sbr.rel (%p697) target = $region56
        $region55: #{fsmn_net_forward.4} parent=43 // pred_region
          %700 = vst [vmem:[%s368] sm:$0xf] %v690
          %701 = vst [vmem:[%s368 + $0x4] sm:$0xf] %v691
        $region56: #{fsmn_net_forward.4} parent=43 // pred_fallthru
          _
        %p702 = scmp.lt.s32.totalorder %s24, 1
        %s703 = scalar_select %p702, %s24, 1
        %s704 = smul.addr %s703, 2
        %s705 = smul.addr %s704, 4
        %s706 = scalar_lea.vmem %s6, %s705
        // Predicated region
        $region57: #{fsmn_net_forward.4} parent=43 // pred_check
          %p707 = pneg %p206
        $region58: #{fsmn_net_forward.4} parent=43 // pred_check_branch
          %709 = sbr.rel (%p707) target = $region60
        $region59: #{fsmn_net_forward.4} parent=43 // pred_region
          _
        $region60: #{fsmn_net_forward.4} parent=43 // pred_fallthru
          _
      $region44: #{fsmn_net_forward.4} parent=5 // pred_fallthru
        _
      %p710 = scmp.le.s32.totalorder 2, %s15
      // Predicated region
      $region61: #{fsmn_net_forward.4} parent=5 // pred_check
        %p711 = pneg %p710
      $region62: #{fsmn_net_forward.4} parent=5 // pred_check_branch
        %713 = sbr.rel (%p711) target = $region64
      $region63: #{fsmn_net_forward.4} parent=5 // pred_region
        %s714 = ssub.s32 %s15, 2
        // Predicated region
        $region65: #{fsmn_net_forward.4} parent=63 // pred_check
          %p715 = pneg %p212
        $region66: #{fsmn_net_forward.4} parent=63 // pred_check_branch
          %717 = sbr.rel (%p715) target = $region68
        $region67: #{fsmn_net_forward.4} parent=63 // pred_region
          %p718 = scmp.lt.s32.totalorder %s26, 1
          %s719 = scalar_select %p718, %s26, 1
          %s720 = smul.addr %s719, 2
          %s721 = smul.addr %s720, 4
          %s722 = scalar_lea.vmem %s6, %s721
        $region68: #{fsmn_net_forward.4} parent=63 // pred_fallthru
          _
      $region64: #{fsmn_net_forward.4} parent=5 // pred_fallthru
        _
    $region6: #{fsmn_net_forward.4} parent=1 // loop_footer
      %s19 = sadd.s32 1, %s15
    $region7: #{fsmn_net_forward.4} parent=1 // loop_footer_branch
      %14 = sbr.rel target = $region3
    $region8: #{fsmn_net_forward.4} parent=1 // loop_exit
      _
    %723 = vsyncpa [#allocation5], 1
    %s724 = scalar_lea.sflag [#allocation5], 1
    %725 = vsyncpa %s724, 1

</llo_original>
